<compile_context>
chip_gen: v6e
topology: v6e:2x2x1
jax: 0.10.0
libtpu: 0.0.40
codegen_flags: <defaults>
</compile_context>

<pallas_src>
import jax
import jax.numpy as jnp
from jax.experimental import pallas as pl
from jax.experimental.pallas import tpu as pltpu

HIDDEN = 16
C1 = HIDDEN * 2    # 32 channels after conv1
C2 = HIDDEN * 4    # 64 channels after conv2
LEAK = 0.2
POS = 25           # 5x5 pooled positions consumed by conv2
K1 = 49            # 7x7 taps of the (conv1 + AvgPool2d) folded kernel


# ---------------- fused Pallas kernel ----------------

def dnet_kernel(p_ref, w1_ref, b1_ref, w2_ref, b2_ref, w3_ref, b3_ref,
                o_ref, h2_ref):
    bn = o_ref.shape[1]  # static batch-block size

    # Stage 1: Conv2d(1->32,5,s2) + AvgPool2d(2) folded into an effective
    # 7x7/stride-4 conv = one lane-dense GEMM (32,49) @ (49, 25*bn), f32 acc.
    pooled = jnp.dot(w1_ref[...], p_ref[...], preferred_element_type=jnp.float32)
    pooled = pooled + b1_ref[...]                      # bias broadcast (32,1)
    pooled = jnp.maximum(pooled, LEAK * pooled)        # LeakyReLU(0.2), f32
    pooled = pooled.astype(jnp.bfloat16)               # cast ONCE for stage 2

    # Repack (32, 25*bn) -> (800, bn) bf16 scratch: 25 lane-aligned column
    # stores at 32-sublane offsets (bf16-packing aligned).
    for p in range(POS):
        h2_ref[p * C1:(p + 1) * C1, :] = pooled[:, p * bn:(p + 1) * bn]

    # Stage 2: Conv2d(32->64,5,s2) has a single 1x1 output -> ONE dense
    # (64,800) @ (800,bn) MXU GEMM (K=800 keeps the 256-deep MXU full), f32 acc.
    h = jnp.dot(w2_ref[...], h2_ref[...], preferred_element_type=jnp.float32)
    h = h + b2_ref[...]                                # bias broadcast (64,1)
    h = jnp.maximum(h, LEAK * h)                       # LeakyReLU(0.2), f32

    # Linear(64->1) as a sublane reduction, then numerically stable Sigmoid.
    logit = jnp.sum(h * w3_ref[...], axis=0, keepdims=True) + b3_ref[...]  # (1,bn)
    o_ref[...] = 0.5 * (jnp.tanh(0.5 * logit) + 1.0)


# ---------------- wrapper (thin XLA glue) ----------------

def d_net_forward(x, params):
    # layout: x is NCHW (N, 1, 28, 28) float32, same as the PyTorch module.
    w1, b1, w2, b2, w3, b3 = params
    n = x.shape[0]
    assert x.shape[1:] == (1, 28, 28), "D_net expects MNIST-sized 1x28x28 inputs"

    # --- weight prep (tiny, traced once) ---
    # Fold AvgPool2d(2) into conv1 -> effective 7x7 kernel, stride 4.
    k1 = w1[:, 0]                                               # (32, 5, 5)
    weff = jnp.zeros((C1, 7, 7), jnp.float32)
    for dy in (0, 1):
        for dx in (0, 1):
            weff = weff.at[:, 2 * dy:2 * dy + 5, 2 * dx:2 * dx + 5].add(0.25 * k1)
    w1m = weff.reshape(C1, K1).astype(jnp.bfloat16)             # (32, 49)
    # Conv2 weights packed lane-densely: column index = p*32 + c, p = ky*5+kx.
    w2m = jnp.transpose(w2, (0, 2, 3, 1)).reshape(C2, POS * C1).astype(jnp.bfloat16)
    b1c = b1.reshape(C1, 1).astype(jnp.float32)
    b2c = b2.reshape(C2, 1).astype(jnp.float32)
    w3c = w3.reshape(C2, 1).astype(jnp.float32)                 # Linear weight column
    b3c = b3.reshape(1, 1).astype(jnp.float32)

    # --- batch blocking: big BN to amortize per-step overhead; multiple
    # balanced steps for large batches so both v7x TensorCores get work. ---
    n128 = -(-n // 128) * 128
    BN = n128 if n128 <= 1024 else 512          # lane-aligned (BN % 128 == 0)
    npad = -(-n // BN) * BN
    g = npad // BN

    # --- patch extraction: crop to the receptive field, cast to bf16 BEFORE
    # the 49x im2col expansion, pad the small input (not the patch tensor),
    # then a single transpose to the (49, g*25*BN) lane-dense layout. ---
    xb = x[:, :, :23, :23].astype(jnp.bfloat16)                 # (n,1,23,23)
    xb = jnp.pad(xb, ((0, npad - n), (0, 0), (0, 0), (0, 0)))
    p6 = jax.lax.conv_general_dilated_patches(
        xb, filter_shape=(7, 7), window_strides=(4, 4), padding="VALID")
    # p6: (npad, 49, 5, 5) bf16 — exactly the 25 positions conv2 consumes.
    pt = (p6.reshape(g, BN, K1, POS)
            .transpose(2, 0, 3, 1)                              # (49, g, 25, BN)
            .reshape(K1, g * POS * BN))                         # bf16 already

    out = pl.pallas_call(
        dnet_kernel,
        out_shape=jax.ShapeDtypeStruct((1, npad), jnp.float32),
        grid=(g,),
        in_specs=[
            pl.BlockSpec((K1, POS * BN), lambda b: (0, b)),     # patches (lane-dense)
            pl.BlockSpec((C1, K1), lambda b: (0, 0)),           # folded conv1 weight
            pl.BlockSpec((C1, 1), lambda b: (0, 0)),            # b1
            pl.BlockSpec((C2, POS * C1), lambda b: (0, 0)),     # conv2 weight (64,800)
            pl.BlockSpec((C2, 1), lambda b: (0, 0)),            # b2
            pl.BlockSpec((C2, 1), lambda b: (0, 0)),            # linear weight
            pl.BlockSpec((1, 1), lambda b: (0, 0)),             # b3
        ],
        out_specs=pl.BlockSpec((1, BN), lambda b: (0, b)),      # lane-dense outputs
        scratch_shapes=[pltpu.VMEM((POS * C1, BN), jnp.bfloat16)],  # (800, BN) repack
        compiler_params=pltpu.CompilerParams(
            dimension_semantics=("parallel",)),
    )(pt, w1m, b1c, w2m, b2c, w3c, b3c)

    return out[0, :n].reshape(n, 1)


# ---------------- pure-XLA reference (for a sanity check) ----------------

def _reference(x, params):
    w1, b1, w2, b2, w3, b3 = params
    y = jax.lax.conv(x, w1, (2, 2), "VALID") + b1.reshape(1, -1, 1, 1)   # (N,32,12,12)
    y = y.reshape(y.shape[0], y.shape[1], 6, 2, 6, 2).mean(axis=(3, 5))  # AvgPool2d(2)
    y = jnp.where(y >= 0, y, LEAK * y)
    y = jax.lax.conv(y, w2, (2, 2), "VALID") + b2.reshape(1, -1, 1, 1)   # (N,64,1,1)
    y = jnp.where(y >= 0, y, LEAK * y)
    y = y.reshape(y.shape[0], -1)                                        # View([-1,64])
    return jax.nn.sigmoid(y @ w3.T + b3)                                 # (N,1)


def init_params(key):
    # Deterministic synthetic parameters (shapes from D_net.__init__).
    ks = jax.random.split(key, 6)
    w1 = jax.random.normal(ks[0], (C1, 1, 5, 5), jnp.float32) * 0.10   # Conv2d(1, 32, 5)
    b1 = jax.random.normal(ks[1], (C1,), jnp.float32) * 0.10
    w2 = jax.random.normal(ks[2], (C2, C1, 5, 5), jnp.float32) * 0.05  # Conv2d(32, 64, 5)
    b2 = jax.random.normal(ks[3], (C2,), jnp.float32) * 0.10
    w3 = jax.random.normal(ks[4], (1, C2), jnp.float32) * 0.10         # Linear(64, 1)
    b3 = jax.random.normal(ks[5], (1,), jnp.float32) * 0.10
    return w1, b1, w2, b2, w3, b3


if __name__ == "__main__":
    key = jax.random.PRNGKey(0)
    pkey, xkey = jax.random.split(key)
    params = init_params(pkey)
    x = jax.random.normal(xkey, (2, 1, 28, 28), jnp.float32)

    out = jax.jit(d_net_forward)(x, params)
    out = jax.block_until_ready(out)

    assert out.shape == (2, 1) and out.dtype == jnp.float32
    assert bool(jnp.all(jnp.isfinite(out)))

    ref = _reference(x, params)
    max_err = float(jnp.max(jnp.abs(out - ref)))
    assert max_err < 5e-2, f"mismatch vs reference: {max_err}"

    print("KERNEL_OK")
</pallas_src>

<mosaic_0001>
module attributes {stable_mosaic.version = 11 : i64} {
  func.func @dnet_kernel(%arg0: i32, %arg1: memref<49x3200xbf16, #tpu.memory_space<vmem>>, %arg2: memref<32x49xbf16, #tpu.memory_space<vmem>>, %arg3: memref<32x1xf32, #tpu.memory_space<vmem>>, %arg4: memref<64x800xbf16, #tpu.memory_space<vmem>>, %arg5: memref<64x1xf32, #tpu.memory_space<vmem>>, %arg6: memref<64x1xf32, #tpu.memory_space<vmem>>, %arg7: memref<1x1xf32, #tpu.memory_space<vmem>>, %arg8: memref<1x128xf32, #tpu.memory_space<vmem>>, %arg9: memref<800x128xbf16, #tpu.memory_space<vmem>>) attributes {dimension_semantics = [#tpu.dimension_semantics<parallel>], iteration_bounds = array<i64: 1>, scalar_prefetch = 0 : i64, scratch_operands = 1 : i64, tpu.core_type = #tpu.core_type<tc>, window_params = [{transform_indices = @transform_0, window_bounds = array<i64: 49, 3200>}, {pipeline_mode = #tpu.pipeline_mode<synchronous>, transform_indices = @transform_1, window_bounds = array<i64: 32, 49>}, {pipeline_mode = #tpu.pipeline_mode<synchronous>, transform_indices = @transform_2, window_bounds = array<i64: 32, 1>}, {pipeline_mode = #tpu.pipeline_mode<synchronous>, transform_indices = @transform_3, window_bounds = array<i64: 64, 800>}, {pipeline_mode = #tpu.pipeline_mode<synchronous>, transform_indices = @transform_4, window_bounds = array<i64: 64, 1>}, {pipeline_mode = #tpu.pipeline_mode<synchronous>, transform_indices = @transform_5, window_bounds = array<i64: 64, 1>}, {pipeline_mode = #tpu.pipeline_mode<synchronous>, transform_indices = @transform_6, window_bounds = array<i64: 1, 1>}, {transform_indices = @transform_7, window_bounds = array<i64: 1, 128>}]} {
    %c0 = arith.constant 0 : index
    %c0_0 = arith.constant 0 : index
    %0 = vector.load %arg2[%c0, %c0_0] : memref<32x49xbf16, #tpu.memory_space<vmem>>, vector<32x49xbf16>
    %c0_1 = arith.constant 0 : index
    %c0_2 = arith.constant 0 : index
    %1 = vector.load %arg1[%c0_1, %c0_2] : memref<49x3200xbf16, #tpu.memory_space<vmem>>, vector<49x3200xbf16>
    %cst = arith.constant dense<0.000000e+00> : vector<32x3200xf32>
    %2 = tpu.matmul %0, %1, %cst {dimension_numbers = #tpu.dot_dimension_numbers<[1], [0], [0], [1], [0, 0, 1, 1], [], []>} : vector<32x49xbf16>, vector<49x3200xbf16>, vector<32x3200xf32> -> vector<32x3200xf32>
    %c0_3 = arith.constant 0 : index
    %c0_4 = arith.constant 0 : index
    %3 = vector.load %arg3[%c0_3, %c0_4] : memref<32x1xf32, #tpu.memory_space<vmem>>, vector<32x1xf32>
    %4 = vector.broadcast %3 : vector<32x1xf32> to vector<32x3200xf32>
    %5 = arith.addf %2, %4 : vector<32x3200xf32>
    %cst_5 = arith.constant 2.000000e-01 : f32
    %6 = vector.broadcast %cst_5 : f32 to vector<32x3200xf32>
    %7 = arith.mulf %6, %5 : vector<32x3200xf32>
    %8 = arith.maximumf %5, %7 : vector<32x3200xf32>
    %9 = arith.truncf %8 : vector<32x3200xf32> to vector<32x3200xbf16>
    %10 = vector.extract_strided_slice %9 {offsets = [0, 0], sizes = [32, 128], strides = [1, 1]} : vector<32x3200xbf16> to vector<32x128xbf16>
    %c0_6 = arith.constant 0 : index
    %c0_7 = arith.constant 0 : index
    %11 = vector.load %arg9[%c0_6, %c0_7] : memref<800x128xbf16, #tpu.memory_space<vmem>>, vector<32x128xbf16>
    tpu.vector_store %arg9[%c0_6, %c0_7], %10 {strides = array<i32>} : memref<800x128xbf16, #tpu.memory_space<vmem>>, vector<32x128xbf16>,
    %12 = vector.extract_strided_slice %9 {offsets = [0, 128], sizes = [32, 128], strides = [1, 1]} : vector<32x3200xbf16> to vector<32x128xbf16>
    %c32 = arith.constant 32 : index
    %c0_8 = arith.constant 0 : index
    %13 = vector.load %arg9[%c32, %c0_8] : memref<800x128xbf16, #tpu.memory_space<vmem>>, vector<32x128xbf16>
    tpu.vector_store %arg9[%c32, %c0_8], %12 {strides = array<i32>} : memref<800x128xbf16, #tpu.memory_space<vmem>>, vector<32x128xbf16>,
    %14 = vector.extract_strided_slice %9 {offsets = [0, 256], sizes = [32, 128], strides = [1, 1]} : vector<32x3200xbf16> to vector<32x128xbf16>
    %c64 = arith.constant 64 : index
    %c0_9 = arith.constant 0 : index
    %15 = vector.load %arg9[%c64, %c0_9] : memref<800x128xbf16, #tpu.memory_space<vmem>>, vector<32x128xbf16>
    tpu.vector_store %arg9[%c64, %c0_9], %14 {strides = array<i32>} : memref<800x128xbf16, #tpu.memory_space<vmem>>, vector<32x128xbf16>,
    %16 = vector.extract_strided_slice %9 {offsets = [0, 384], sizes = [32, 128], strides = [1, 1]} : vector<32x3200xbf16> to vector<32x128xbf16>
    %c96 = arith.constant 96 : index
    %c0_10 = arith.constant 0 : index
    %17 = vector.load %arg9[%c96, %c0_10] : memref<800x128xbf16, #tpu.memory_space<vmem>>, vector<32x128xbf16>
    tpu.vector_store %arg9[%c96, %c0_10], %16 {strides = array<i32>} : memref<800x128xbf16, #tpu.memory_space<vmem>>, vector<32x128xbf16>,
    %18 = vector.extract_strided_slice %9 {offsets = [0, 512], sizes = [32, 128], strides = [1, 1]} : vector<32x3200xbf16> to vector<32x128xbf16>
    %c128 = arith.constant 128 : index
    %c0_11 = arith.constant 0 : index
    %19 = vector.load %arg9[%c128, %c0_11] : memref<800x128xbf16, #tpu.memory_space<vmem>>, vector<32x128xbf16>
    tpu.vector_store %arg9[%c128, %c0_11], %18 {strides = array<i32>} : memref<800x128xbf16, #tpu.memory_space<vmem>>, vector<32x128xbf16>,
    %20 = vector.extract_strided_slice %9 {offsets = [0, 640], sizes = [32, 128], strides = [1, 1]} : vector<32x3200xbf16> to vector<32x128xbf16>
    %c160 = arith.constant 160 : index
    %c0_12 = arith.constant 0 : index
    %21 = vector.load %arg9[%c160, %c0_12] : memref<800x128xbf16, #tpu.memory_space<vmem>>, vector<32x128xbf16>
    tpu.vector_store %arg9[%c160, %c0_12], %20 {strides = array<i32>} : memref<800x128xbf16, #tpu.memory_space<vmem>>, vector<32x128xbf16>,
    %22 = vector.extract_strided_slice %9 {offsets = [0, 768], sizes = [32, 128], strides = [1, 1]} : vector<32x3200xbf16> to vector<32x128xbf16>
    %c192 = arith.constant 192 : index
    %c0_13 = arith.constant 0 : index
    %23 = vector.load %arg9[%c192, %c0_13] : memref<800x128xbf16, #tpu.memory_space<vmem>>, vector<32x128xbf16>
    tpu.vector_store %arg9[%c192, %c0_13], %22 {strides = array<i32>} : memref<800x128xbf16, #tpu.memory_space<vmem>>, vector<32x128xbf16>,
    %24 = vector.extract_strided_slice %9 {offsets = [0, 896], sizes = [32, 128], strides = [1, 1]} : vector<32x3200xbf16> to vector<32x128xbf16>
    %c224 = arith.constant 224 : index
    %c0_14 = arith.constant 0 : index
    %25 = vector.load %arg9[%c224, %c0_14] : memref<800x128xbf16, #tpu.memory_space<vmem>>, vector<32x128xbf16>
    tpu.vector_store %arg9[%c224, %c0_14], %24 {strides = array<i32>} : memref<800x128xbf16, #tpu.memory_space<vmem>>, vector<32x128xbf16>,
    %26 = vector.extract_strided_slice %9 {offsets = [0, 1024], sizes = [32, 128], strides = [1, 1]} : vector<32x3200xbf16> to vector<32x128xbf16>
    %c256 = arith.constant 256 : index
    %c0_15 = arith.constant 0 : index
    %27 = vector.load %arg9[%c256, %c0_15] : memref<800x128xbf16, #tpu.memory_space<vmem>>, vector<32x128xbf16>
    tpu.vector_store %arg9[%c256, %c0_15], %26 {strides = array<i32>} : memref<800x128xbf16, #tpu.memory_space<vmem>>, vector<32x128xbf16>,
    %28 = vector.extract_strided_slice %9 {offsets = [0, 1152], sizes = [32, 128], strides = [1, 1]} : vector<32x3200xbf16> to vector<32x128xbf16>
    %c288 = arith.constant 288 : index
    %c0_16 = arith.constant 0 : index
    %29 = vector.load %arg9[%c288, %c0_16] : memref<800x128xbf16, #tpu.memory_space<vmem>>, vector<32x128xbf16>
    tpu.vector_store %arg9[%c288, %c0_16], %28 {strides = array<i32>} : memref<800x128xbf16, #tpu.memory_space<vmem>>, vector<32x128xbf16>,
    %30 = vector.extract_strided_slice %9 {offsets = [0, 1280], sizes = [32, 128], strides = [1, 1]} : vector<32x3200xbf16> to vector<32x128xbf16>
    %c320 = arith.constant 320 : index
    %c0_17 = arith.constant 0 : index
    %31 = vector.load %arg9[%c320, %c0_17] : memref<800x128xbf16, #tpu.memory_space<vmem>>, vector<32x128xbf16>
    tpu.vector_store %arg9[%c320, %c0_17], %30 {strides = array<i32>} : memref<800x128xbf16, #tpu.memory_space<vmem>>, vector<32x128xbf16>,
    %32 = vector.extract_strided_slice %9 {offsets = [0, 1408], sizes = [32, 128], strides = [1, 1]} : vector<32x3200xbf16> to vector<32x128xbf16>
    %c352 = arith.constant 352 : index
    %c0_18 = arith.constant 0 : index
    %33 = vector.load %arg9[%c352, %c0_18] : memref<800x128xbf16, #tpu.memory_space<vmem>>, vector<32x128xbf16>
    tpu.vector_store %arg9[%c352, %c0_18], %32 {strides = array<i32>} : memref<800x128xbf16, #tpu.memory_space<vmem>>, vector<32x128xbf16>,
    %34 = vector.extract_strided_slice %9 {offsets = [0, 1536], sizes = [32, 128], strides = [1, 1]} : vector<32x3200xbf16> to vector<32x128xbf16>
    %c384 = arith.constant 384 : index
    %c0_19 = arith.constant 0 : index
    %35 = vector.load %arg9[%c384, %c0_19] : memref<800x128xbf16, #tpu.memory_space<vmem>>, vector<32x128xbf16>
    tpu.vector_store %arg9[%c384, %c0_19], %34 {strides = array<i32>} : memref<800x128xbf16, #tpu.memory_space<vmem>>, vector<32x128xbf16>,
    %36 = vector.extract_strided_slice %9 {offsets = [0, 1664], sizes = [32, 128], strides = [1, 1]} : vector<32x3200xbf16> to vector<32x128xbf16>
    %c416 = arith.constant 416 : index
    %c0_20 = arith.constant 0 : index
    %37 = vector.load %arg9[%c416, %c0_20] : memref<800x128xbf16, #tpu.memory_space<vmem>>, vector<32x128xbf16>
    tpu.vector_store %arg9[%c416, %c0_20], %36 {strides = array<i32>} : memref<800x128xbf16, #tpu.memory_space<vmem>>, vector<32x128xbf16>,
    %38 = vector.extract_strided_slice %9 {offsets = [0, 1792], sizes = [32, 128], strides = [1, 1]} : vector<32x3200xbf16> to vector<32x128xbf16>
    %c448 = arith.constant 448 : index
    %c0_21 = arith.constant 0 : index
    %39 = vector.load %arg9[%c448, %c0_21] : memref<800x128xbf16, #tpu.memory_space<vmem>>, vector<32x128xbf16>
    tpu.vector_store %arg9[%c448, %c0_21], %38 {strides = array<i32>} : memref<800x128xbf16, #tpu.memory_space<vmem>>, vector<32x128xbf16>,
    %40 = vector.extract_strided_slice %9 {offsets = [0, 1920], sizes = [32, 128], strides = [1, 1]} : vector<32x3200xbf16> to vector<32x128xbf16>
    %c480 = arith.constant 480 : index
    %c0_22 = arith.constant 0 : index
    %41 = vector.load %arg9[%c480, %c0_22] : memref<800x128xbf16, #tpu.memory_space<vmem>>, vector<32x128xbf16>
    tpu.vector_store %arg9[%c480, %c0_22], %40 {strides = array<i32>} : memref<800x128xbf16, #tpu.memory_space<vmem>>, vector<32x128xbf16>,
    %42 = vector.extract_strided_slice %9 {offsets = [0, 2048], sizes = [32, 128], strides = [1, 1]} : vector<32x3200xbf16> to vector<32x128xbf16>
    %c512 = arith.constant 512 : index
    %c0_23 = arith.constant 0 : index
    %43 = vector.load %arg9[%c512, %c0_23] : memref<800x128xbf16, #tpu.memory_space<vmem>>, vector<32x128xbf16>
    tpu.vector_store %arg9[%c512, %c0_23], %42 {strides = array<i32>} : memref<800x128xbf16, #tpu.memory_space<vmem>>, vector<32x128xbf16>,
    %44 = vector.extract_strided_slice %9 {offsets = [0, 2176], sizes = [32, 128], strides = [1, 1]} : vector<32x3200xbf16> to vector<32x128xbf16>
    %c544 = arith.constant 544 : index
    %c0_24 = arith.constant 0 : index
    %45 = vector.load %arg9[%c544, %c0_24] : memref<800x128xbf16, #tpu.memory_space<vmem>>, vector<32x128xbf16>
    tpu.vector_store %arg9[%c544, %c0_24], %44 {strides = array<i32>} : memref<800x128xbf16, #tpu.memory_space<vmem>>, vector<32x128xbf16>,
    %46 = vector.extract_strided_slice %9 {offsets = [0, 2304], sizes = [32, 128], strides = [1, 1]} : vector<32x3200xbf16> to vector<32x128xbf16>
    %c576 = arith.constant 576 : index
    %c0_25 = arith.constant 0 : index
    %47 = vector.load %arg9[%c576, %c0_25] : memref<800x128xbf16, #tpu.memory_space<vmem>>, vector<32x128xbf16>
    tpu.vector_store %arg9[%c576, %c0_25], %46 {strides = array<i32>} : memref<800x128xbf16, #tpu.memory_space<vmem>>, vector<32x128xbf16>,
    %48 = vector.extract_strided_slice %9 {offsets = [0, 2432], sizes = [32, 128], strides = [1, 1]} : vector<32x3200xbf16> to vector<32x128xbf16>
    %c608 = arith.constant 608 : index
    %c0_26 = arith.constant 0 : index
    %49 = vector.load %arg9[%c608, %c0_26] : memref<800x128xbf16, #tpu.memory_space<vmem>>, vector<32x128xbf16>
    tpu.vector_store %arg9[%c608, %c0_26], %48 {strides = array<i32>} : memref<800x128xbf16, #tpu.memory_space<vmem>>, vector<32x128xbf16>,
    %50 = vector.extract_strided_slice %9 {offsets = [0, 2560], sizes = [32, 128], strides = [1, 1]} : vector<32x3200xbf16> to vector<32x128xbf16>
    %c640 = arith.constant 640 : index
    %c0_27 = arith.constant 0 : index
    %51 = vector.load %arg9[%c640, %c0_27] : memref<800x128xbf16, #tpu.memory_space<vmem>>, vector<32x128xbf16>
    tpu.vector_store %arg9[%c640, %c0_27], %50 {strides = array<i32>} : memref<800x128xbf16, #tpu.memory_space<vmem>>, vector<32x128xbf16>,
    %52 = vector.extract_strided_slice %9 {offsets = [0, 2688], sizes = [32, 128], strides = [1, 1]} : vector<32x3200xbf16> to vector<32x128xbf16>
    %c672 = arith.constant 672 : index
    %c0_28 = arith.constant 0 : index
    %53 = vector.load %arg9[%c672, %c0_28] : memref<800x128xbf16, #tpu.memory_space<vmem>>, vector<32x128xbf16>
    tpu.vector_store %arg9[%c672, %c0_28], %52 {strides = array<i32>} : memref<800x128xbf16, #tpu.memory_space<vmem>>, vector<32x128xbf16>,
    %54 = vector.extract_strided_slice %9 {offsets = [0, 2816], sizes = [32, 128], strides = [1, 1]} : vector<32x3200xbf16> to vector<32x128xbf16>
    %c704 = arith.constant 704 : index
    %c0_29 = arith.constant 0 : index
    %55 = vector.load %arg9[%c704, %c0_29] : memref<800x128xbf16, #tpu.memory_space<vmem>>, vector<32x128xbf16>
    tpu.vector_store %arg9[%c704, %c0_29], %54 {strides = array<i32>} : memref<800x128xbf16, #tpu.memory_space<vmem>>, vector<32x128xbf16>,
    %56 = vector.extract_strided_slice %9 {offsets = [0, 2944], sizes = [32, 128], strides = [1, 1]} : vector<32x3200xbf16> to vector<32x128xbf16>
    %c736 = arith.constant 736 : index
    %c0_30 = arith.constant 0 : index
    %57 = vector.load %arg9[%c736, %c0_30] : memref<800x128xbf16, #tpu.memory_space<vmem>>, vector<32x128xbf16>
    tpu.vector_store %arg9[%c736, %c0_30], %56 {strides = array<i32>} : memref<800x128xbf16, #tpu.memory_space<vmem>>, vector<32x128xbf16>,
    %58 = vector.extract_strided_slice %9 {offsets = [0, 3072], sizes = [32, 128], strides = [1, 1]} : vector<32x3200xbf16> to vector<32x128xbf16>
    %c768 = arith.constant 768 : index
    %c0_31 = arith.constant 0 : index
    %59 = vector.load %arg9[%c768, %c0_31] : memref<800x128xbf16, #tpu.memory_space<vmem>>, vector<32x128xbf16>
    tpu.vector_store %arg9[%c768, %c0_31], %58 {strides = array<i32>} : memref<800x128xbf16, #tpu.memory_space<vmem>>, vector<32x128xbf16>,
    %c0_32 = arith.constant 0 : index
    %c0_33 = arith.constant 0 : index
    %60 = vector.load %arg4[%c0_32, %c0_33] : memref<64x800xbf16, #tpu.memory_space<vmem>>, vector<64x800xbf16>
    %c0_34 = arith.constant 0 : index
    %c0_35 = arith.constant 0 : index
    %61 = vector.load %arg9[%c0_34, %c0_35] : memref<800x128xbf16, #tpu.memory_space<vmem>>, vector<800x128xbf16>
    %cst_36 = arith.constant dense<0.000000e+00> : vector<64x128xf32>
    %62 = tpu.matmul %60, %61, %cst_36 {dimension_numbers = #tpu.dot_dimension_numbers<[1], [0], [0], [1], [0, 0, 1, 1], [], []>} : vector<64x800xbf16>, vector<800x128xbf16>, vector<64x128xf32> -> vector<64x128xf32>
    %c0_37 = arith.constant 0 : index
    %c0_38 = arith.constant 0 : index
    %63 = vector.load %arg5[%c0_37, %c0_38] : memref<64x1xf32, #tpu.memory_space<vmem>>, vector<64x1xf32>
    %64 = vector.broadcast %63 : vector<64x1xf32> to vector<64x128xf32>
    %65 = arith.addf %62, %64 : vector<64x128xf32>
    %cst_39 = arith.constant 2.000000e-01 : f32
    %66 = vector.broadcast %cst_39 : f32 to vector<64x128xf32>
    %67 = arith.mulf %66, %65 : vector<64x128xf32>
    %68 = arith.maximumf %65, %67 : vector<64x128xf32>
    %c0_40 = arith.constant 0 : index
    %c0_41 = arith.constant 0 : index
    %69 = vector.load %arg6[%c0_40, %c0_41] : memref<64x1xf32, #tpu.memory_space<vmem>>, vector<64x1xf32>
    %70 = vector.broadcast %69 : vector<64x1xf32> to vector<64x128xf32>
    %71 = arith.mulf %68, %70 : vector<64x128xf32>
    %cst_42 = arith.constant dense<0.000000e+00> : vector<128xf32>
    %72 = vector.multi_reduction <add>, %71, %cst_42 [0] : vector<64x128xf32> to vector<128xf32>
    %73 = vector.shape_cast %72 : vector<128xf32> to vector<1x128xf32>
    %c0_43 = arith.constant 0 : index
    %c0_44 = arith.constant 0 : index
    %74 = vector.load %arg7[%c0_43, %c0_44] : memref<1x1xf32, #tpu.memory_space<vmem>>, vector<1x1xf32>
    %75 = vector.broadcast %74 : vector<1x1xf32> to vector<1x128xf32>
    %76 = arith.addf %73, %75 : vector<1x128xf32>
    %cst_45 = arith.constant 5.000000e-01 : f32
    %77 = vector.broadcast %cst_45 : f32 to vector<1x128xf32>
    %78 = arith.mulf %77, %76 : vector<1x128xf32>
    %79 = math.tanh %78 : vector<1x128xf32>
    %cst_46 = arith.constant 1.000000e+00 : f32
    %80 = vector.broadcast %cst_46 : f32 to vector<1x128xf32>
    %81 = arith.addf %79, %80 : vector<1x128xf32>
    %cst_47 = arith.constant 5.000000e-01 : f32
    %82 = vector.broadcast %cst_47 : f32 to vector<1x128xf32>
    %83 = arith.mulf %82, %81 : vector<1x128xf32>
    %c0_48 = arith.constant 0 : index
    %c0_49 = arith.constant 0 : index
    %84 = vector.load %arg8[%c0_48, %c0_49] : memref<1x128xf32, #tpu.memory_space<vmem>>, vector<1x128xf32>
    tpu.vector_store %arg8[%c0_48, %c0_49], %83 {strides = array<i32>} : memref<1x128xf32, #tpu.memory_space<vmem>>, vector<1x128xf32>,
    return
  }
  func.func @transform_0(%arg0: i32) -> (i32, i32) {
    %c0_i32 = arith.constant 0 : i32
    %c0_i32_0 = arith.constant 0 : i32
    return %c0_i32, %arg0 : i32, i32
  }
  func.func @transform_1(%arg0: i32) -> (i32, i32) {
    %c0_i32 = arith.constant 0 : i32
    %c0_i32_0 = arith.constant 0 : i32
    %c0_i32_1 = arith.constant 0 : i32
    return %c0_i32, %c0_i32_0 : i32, i32
  }
  func.func @transform_2(%arg0: i32) -> (i32, i32) {
    %c0_i32 = arith.constant 0 : i32
    %c0_i32_0 = arith.constant 0 : i32
    %c0_i32_1 = arith.constant 0 : i32
    return %c0_i32, %c0_i32_0 : i32, i32
  }
  func.func @transform_3(%arg0: i32) -> (i32, i32) {
    %c0_i32 = arith.constant 0 : i32
    %c0_i32_0 = arith.constant 0 : i32
    %c0_i32_1 = arith.constant 0 : i32
    return %c0_i32, %c0_i32_0 : i32, i32
  }
  func.func @transform_4(%arg0: i32) -> (i32, i32) {
    %c0_i32 = arith.constant 0 : i32
    %c0_i32_0 = arith.constant 0 : i32
    %c0_i32_1 = arith.constant 0 : i32
    return %c0_i32, %c0_i32_0 : i32, i32
  }
  func.func @transform_5(%arg0: i32) -> (i32, i32) {
    %c0_i32 = arith.constant 0 : i32
    %c0_i32_0 = arith.constant 0 : i32
    %c0_i32_1 = arith.constant 0 : i32
    return %c0_i32, %c0_i32_0 : i32, i32
  }
  func.func @transform_6(%arg0: i32) -> (i32, i32) {
    %c0_i32 = arith.constant 0 : i32
    %c0_i32_0 = arith.constant 0 : i32
    %c0_i32_1 = arith.constant 0 : i32
    return %c0_i32, %c0_i32_0 : i32, i32
  }
  func.func @transform_7(%arg0: i32) -> (i32, i32) {
    %c0_i32 = arith.constant 0 : i32
    %c0_i32_0 = arith.constant 0 : i32
    return %c0_i32, %arg0 : i32, i32
  }
}

</mosaic_0001>

<llo_original>
// kernel: d_net_forward.1
$region0: #{d_net_forward.1}
  #allocation0 [shape = 'u32[]', space=smem, size = 0x4, offset = 0x4, fixed_abs, tag = 'smem constant byte address 0x4 - core index']
  #allocation1 [shape = 'u32[144,128]{1,0:T(1,128)}', space=vmem, size = 0x12000, scoped, tag = 'internal scratch']
  #allocation2 [shape = 'bf16[800,128]{1,0:T(8,128)(2,1)}', space=vmem, size = 0x32000, scoped, tag = 'scratch operand']
  #allocation3 [shape = 'f32[1,1]{1,0:T(1,128)S(1)}', space=vmem, size = 0x200, scoped, tag = 'scoped memory for d_net_forward.1']
  %s0 = inlined_call_operand.vmem [shape: bf16[49,3200], index: 0, kind: input, shape index: {}]
  %s1 = inlined_call_operand.vmem [shape: bf16[32,49], index: 1, kind: input, shape index: {}]
  %s2 = inlined_call_operand.vmem [shape: f32[32,1], index: 2, kind: input, shape index: {}]
  %s3 = inlined_call_operand.vmem [shape: bf16[64,800], index: 3, kind: input, shape index: {}]
  %s4 = inlined_call_operand.vmem [shape: f32[64,1], index: 4, kind: input, shape index: {}]
  %s5 = inlined_call_operand.vmem [shape: f32[64,1], index: 5, kind: input, shape index: {}]
  %s6 = inlined_call_operand.<no memory space> [shape: f32[1,1], index: 6, kind: input, shape index: {}]
  %s7 = inlined_call_operand.vmem [shape: f32[1,128], index: 7, kind: output, shape index: {}]
  %s8 = sld [smem:[#allocation0]]
  $region38: #{d_net_forward.1} parent=0
    _
  %s10 = ssub.s32 1, %s8
  %s11 = scalar_select 0, %s10, %s8
  %v12 = vstv %s6
  %13 = vst [vmem:[#allocation3] sm:$0x1] %v12
  // Predicated region
  $region2: #{d_net_forward.1} parent=0 // pred_check
    _
  $region3: #{d_net_forward.1} parent=0 // pred_check_branch
    %15 = sbr.rel (0) target = $region5
  $region4: #{d_net_forward.1} parent=0 // pred_region
    _
  $region5: #{d_net_forward.1} parent=0 // pred_fallthru
    _
  // Predicated region
  $region6: #{d_net_forward.1} parent=0 // pred_check
    _
  $region7: #{d_net_forward.1} parent=0 // pred_check_branch
    %17 = sbr.rel (0) target = $region9
  $region8: #{d_net_forward.1} parent=0 // pred_region
    _
  $region9: #{d_net_forward.1} parent=0 // pred_fallthru
    _
  // Predicated region
  $region10: #{d_net_forward.1} parent=0 // pred_check
    _
  $region11: #{d_net_forward.1} parent=0 // pred_check_branch
    %19 = sbr.rel (0) target = $region13
  $region12: #{d_net_forward.1} parent=0 // pred_region
    _
  $region13: #{d_net_forward.1} parent=0 // pred_fallthru
    _
  // Predicated region
  $region14: #{d_net_forward.1} parent=0 // pred_check
    _
  $region15: #{d_net_forward.1} parent=0 // pred_check_branch
    %21 = sbr.rel (0) target = $region17
  $region16: #{d_net_forward.1} parent=0 // pred_region
    _
  $region17: #{d_net_forward.1} parent=0 // pred_fallthru
    _
  // Predicated region
  $region18: #{d_net_forward.1} parent=0 // pred_check
    _
  $region19: #{d_net_forward.1} parent=0 // pred_check_branch
    %23 = sbr.rel (0) target = $region21
  $region20: #{d_net_forward.1} parent=0 // pred_region
    _
  $region21: #{d_net_forward.1} parent=0 // pred_fallthru
    _
  // Predicated region
  $region22: #{d_net_forward.1} parent=0 // pred_check
    _
  $region23: #{d_net_forward.1} parent=0 // pred_check_branch
    %25 = sbr.rel (0) target = $region25
  $region24: #{d_net_forward.1} parent=0 // pred_region
    _
  $region25: #{d_net_forward.1} parent=0 // pred_fallthru
    _
  // Predicated region
  $region26: #{d_net_forward.1} parent=0 // pred_check
    _
  $region27: #{d_net_forward.1} parent=0 // pred_check_branch
    %27 = sbr.rel (0) target = $region29
  $region28: #{d_net_forward.1} parent=0 // pred_region
    _
  $region29: #{d_net_forward.1} parent=0 // pred_fallthru
    _
  %v29 = vld [vmem:[%s1] sm:$0xf]
  %v30 = vld [vmem:[%s1 + $0x4] sm:$0xf]
  %v31 = vld [vmem:[%s1 + $0x8] sm:$0xf]
  %v32 = vld [vmem:[%s1 + $0xc] sm:$0xf]
  %v33 = vld [vmem:[%s0] sm:$0xff]
  %v34 = vld [vmem:[%s0 + $0x8] sm:$0xff]
  %v35 = vld [vmem:[%s0 + $0x10] sm:$0xff]
  %v36 = vld [vmem:[%s0 + $0x18] sm:$0xff]
  %v37 = vld [vmem:[%s0 + $0x20] sm:$0xff]
  %v38 = vld [vmem:[%s0 + $0x28] sm:$0xff]
  %v39 = vld [vmem:[%s0 + $0x30] sm:$0xff]
  %v40 = vld [vmem:[%s0 + $0x38] sm:$0xff]
  %v41 = vld [vmem:[%s0 + $0x40] sm:$0xff]
  %v42 = vld [vmem:[%s0 + $0x48] sm:$0xff]
  %v43 = vld [vmem:[%s0 + $0x50] sm:$0xff]
  %v44 = vld [vmem:[%s0 + $0x58] sm:$0xff]
  %v45 = vld [vmem:[%s0 + $0x60] sm:$0xf]
  %v46 = vld [vmem:[%s0 + $0x64] sm:$0xff]
  %v47 = vld [vmem:[%s0 + $0x6c] sm:$0xff]
  %v48 = vld [vmem:[%s0 + $0x74] sm:$0xff]
  %v49 = vld [vmem:[%s0 + $0x7c] sm:$0xff]
  %v50 = vld [vmem:[%s0 + $0x84] sm:$0xff]
  %v51 = vld [vmem:[%s0 + $0x8c] sm:$0xff]
  %v52 = vld [vmem:[%s0 + $0x94] sm:$0xff]
  %v53 = vld [vmem:[%s0 + $0x9c] sm:$0xff]
  %v54 = vld [vmem:[%s0 + $0xa4] sm:$0xff]
  %v55 = vld [vmem:[%s0 + $0xac] sm:$0xff]
  %v56 = vld [vmem:[%s0 + $0xb4] sm:$0xff]
  %v57 = vld [vmem:[%s0 + $0xbc] sm:$0xff]
  %v58 = vld [vmem:[%s0 + $0xc4] sm:$0xf]
  %v59 = vld [vmem:[%s0 + $0xc8] sm:$0xff]
  %v60 = vld [vmem:[%s0 + $0xd0] sm:$0xff]
  %v61 = vld [vmem:[%s0 + $0xd8] sm:$0xff]
  %v62 = vld [vmem:[%s0 + $0xe0] sm:$0xff]
  %v63 = vld [vmem:[%s0 + $0xe8] sm:$0xff]
  %v64 = vld [vmem:[%s0 + $0xf0] sm:$0xff]
  %v65 = vld [vmem:[%s0 + $0xf8] sm:$0xff]
  %v66 = vld [vmem:[%s0 + $0x100] sm:$0xff]
  %v67 = vld [vmem:[%s0 + $0x108] sm:$0xff]
  %v68 = vld [vmem:[%s0 + $0x110] sm:$0xff]
  %v69 = vld [vmem:[%s0 + $0x118] sm:$0xff]
  %v70 = vld [vmem:[%s0 + $0x120] sm:$0xff]
  %v71 = vld [vmem:[%s0 + $0x128] sm:$0xf]
  %v72 = vld [vmem:[%s0 + $0x12c] sm:$0xff]
  %v73 = vld [vmem:[%s0 + $0x134] sm:$0xff]
  %v74 = vld [vmem:[%s0 + $0x13c] sm:$0xff]
  %v75 = vld [vmem:[%s0 + $0x144] sm:$0xff]
  %v76 = vld [vmem:[%s0 + $0x14c] sm:$0xff]
  %v77 = vld [vmem:[%s0 + $0x154] sm:$0xff]
  %v78 = vld [vmem:[%s0 + $0x15c] sm:$0xff]
  %v79 = vld [vmem:[%s0 + $0x164] sm:$0xff]
  %v80 = vld [vmem:[%s0 + $0x16c] sm:$0xff]
  %v81 = vld [vmem:[%s0 + $0x174] sm:$0xff]
  %v82 = vld [vmem:[%s0 + $0x17c] sm:$0xff]
  %v83 = vld [vmem:[%s0 + $0x184] sm:$0xff]
  %v84 = vld [vmem:[%s0 + $0x18c] sm:$0xf]
  %v85 = vld [vmem:[%s0 + $0x190] sm:$0xff]
  %v86 = vld [vmem:[%s0 + $0x198] sm:$0xff]
  %v87 = vld [vmem:[%s0 + $0x1a0] sm:$0xff]
  %v88 = vld [vmem:[%s0 + $0x1a8] sm:$0xff]
  %v89 = vld [vmem:[%s0 + $0x1b0] sm:$0xff]
  %v90 = vld [vmem:[%s0 + $0x1b8] sm:$0xff]
  %v91 = vld [vmem:[%s0 + $0x1c0] sm:$0xff]
  %v92 = vld [vmem:[%s0 + $0x1c8] sm:$0xff]
  %v93 = vld [vmem:[%s0 + $0x1d0] sm:$0xff]
  %v94 = vld [vmem:[%s0 + $0x1d8] sm:$0xff]
  %v95 = vld [vmem:[%s0 + $0x1e0] sm:$0xff]
  %v96 = vld [vmem:[%s0 + $0x1e8] sm:$0xff]
  %v97 = vld [vmem:[%s0 + $0x1f0] sm:$0xf]
  %v98 = vld [vmem:[%s0 + $0x1f4] sm:$0xff]
  %v99 = vld [vmem:[%s0 + $0x1fc] sm:$0xff]
  %v100 = vld [vmem:[%s0 + $0x204] sm:$0xff]
  %v101 = vld [vmem:[%s0 + $0x20c] sm:$0xff]
  %v102 = vld [vmem:[%s0 + $0x214] sm:$0xff]
  %v103 = vld [vmem:[%s0 + $0x21c] sm:$0xff]
  %v104 = vld [vmem:[%s0 + $0x224] sm:$0xff]
  %v105 = vld [vmem:[%s0 + $0x22c] sm:$0xff]
  %v106 = vld [vmem:[%s0 + $0x234] sm:$0xff]
  %v107 = vld [vmem:[%s0 + $0x23c] sm:$0xff]
  %v108 = vld [vmem:[%s0 + $0x244] sm:$0xff]
  %v109 = vld [vmem:[%s0 + $0x24c] sm:$0xff]
  %v110 = vld [vmem:[%s0 + $0x254] sm:$0xf]
  %v111 = vld [vmem:[%s0 + $0x258] sm:$0x11]
  %v112 = vld [vmem:[%s0 + $0x260] sm:$0x11]
  %v113 = vld [vmem:[%s0 + $0x268] sm:$0x11]
  %v114 = vld [vmem:[%s0 + $0x270] sm:$0x11]
  %v115 = vld [vmem:[%s0 + $0x278] sm:$0x11]
  %v116 = vld [vmem:[%s0 + $0x280] sm:$0x11]
  %v117 = vld [vmem:[%s0 + $0x288] sm:$0x11]
  %v118 = vld [vmem:[%s0 + $0x290] sm:$0x11]
  %v119 = vld [vmem:[%s0 + $0x298] sm:$0x11]
  %v120 = vld [vmem:[%s0 + $0x2a0] sm:$0x11]
  %v121 = vld [vmem:[%s0 + $0x2a8] sm:$0x11]
  %v122 = vld [vmem:[%s0 + $0x2b0] sm:$0x11]
  %v123 = vld [vmem:[%s0 + $0x2b8] sm:$0x1]
  %v124 = vld [vmem:[%s2] sm:$0xff]
  %v125 = vld [vmem:[%s2 + $0x8] sm:$0xff]
  %v126 = vld [vmem:[%s2 + $0x10] sm:$0xff]
  %v127 = vld [vmem:[%s2 + $0x18] sm:$0xff]
  %129 = vset.pattern.permute.xlu0 0
  %130 = vperm.xlu0 %129, %v124
  %v131 = vpop.permute.xlu0 %130
  %134 = vset.pattern.permute.xlu0 0
  %135 = vperm.xlu0 %134, %v125
  %v136 = vpop.permute.xlu0 %135
  %139 = vset.pattern.permute.xlu0 0
  %140 = vperm.xlu0 %139, %v126
  %v141 = vpop.permute.xlu0 %140
  %144 = vset.pattern.permute.xlu0 0
  %145 = vperm.xlu0 %144, %v127
  %v146 = vpop.permute.xlu0 %145
  %v152 = vunpack.c.l.b16 %v29
  %v153 = vunpack.c.l.b16 %v30
  %v154 = vunpack.c.l.b16 %v31
  %v155 = vunpack.c.l.b16 %v32
  %v156 = vpack.c.b16 %v153, %v152
  %v157 = vpack.c.b16 %v155, %v154
  %v249 = vunpack.c.l.b16 %v33
  %v250 = vunpack.c.h.b16 %v33
  %v251 = vunpack.c.l.b16 %v34
  %v252 = vunpack.c.h.b16 %v34
  %v253 = vunpack.c.l.b16 %v35
  %v254 = vunpack.c.h.b16 %v35
  %v255 = vunpack.c.l.b16 %v36
  %v256 = vunpack.c.h.b16 %v36
  %v257 = vunpack.c.l.b16 %v37
  %v258 = vunpack.c.h.b16 %v37
  %v259 = vunpack.c.l.b16 %v38
  %v260 = vunpack.c.h.b16 %v38
  %v261 = vunpack.c.l.b16 %v39
  %v262 = vunpack.c.h.b16 %v39
  %v263 = vunpack.c.l.b16 %v40
  %v264 = vunpack.c.h.b16 %v40
  %v265 = vunpack.c.l.b16 %v41
  %v266 = vunpack.c.h.b16 %v41
  %v267 = vunpack.c.l.b16 %v42
  %v268 = vunpack.c.h.b16 %v42
  %v269 = vunpack.c.l.b16 %v43
  %v270 = vunpack.c.h.b16 %v43
  %v271 = vunpack.c.l.b16 %v44
  %v272 = vunpack.c.h.b16 %v44
  %v273 = vunpack.c.l.b16 %v45
  %v274 = vunpack.c.l.b16 %v46
  %v275 = vunpack.c.h.b16 %v46
  %v276 = vunpack.c.l.b16 %v47
  %v277 = vunpack.c.h.b16 %v47
  %v278 = vunpack.c.l.b16 %v48
  %v279 = vunpack.c.h.b16 %v48
  %v280 = vunpack.c.l.b16 %v49
  %v281 = vunpack.c.h.b16 %v49
  %v282 = vunpack.c.l.b16 %v50
  %v283 = vunpack.c.h.b16 %v50
  %v284 = vunpack.c.l.b16 %v51
  %v285 = vunpack.c.h.b16 %v51
  %v286 = vunpack.c.l.b16 %v52
  %v287 = vunpack.c.h.b16 %v52
  %v288 = vunpack.c.l.b16 %v53
  %v289 = vunpack.c.h.b16 %v53
  %v290 = vunpack.c.l.b16 %v54
  %v291 = vunpack.c.h.b16 %v54
  %v292 = vunpack.c.l.b16 %v55
  %v293 = vunpack.c.h.b16 %v55
  %v294 = vunpack.c.l.b16 %v56
  %v295 = vunpack.c.h.b16 %v56
  %v296 = vunpack.c.l.b16 %v57
  %v297 = vunpack.c.h.b16 %v57
  %v298 = vunpack.c.l.b16 %v58
  %v299 = vunpack.c.l.b16 %v59
  %v300 = vunpack.c.h.b16 %v59
  %v301 = vunpack.c.l.b16 %v60
  %v302 = vunpack.c.h.b16 %v60
  %v303 = vunpack.c.l.b16 %v61
  %v304 = vunpack.c.h.b16 %v61
  %v305 = vunpack.c.l.b16 %v62
  %v306 = vunpack.c.h.b16 %v62
  %v307 = vunpack.c.l.b16 %v63
  %v308 = vunpack.c.h.b16 %v63
  %v309 = vunpack.c.l.b16 %v64
  %v310 = vunpack.c.h.b16 %v64
  %v311 = vunpack.c.l.b16 %v65
  %v312 = vunpack.c.h.b16 %v65
  %v313 = vunpack.c.l.b16 %v66
  %v314 = vunpack.c.h.b16 %v66
  %v315 = vunpack.c.l.b16 %v67
  %v316 = vunpack.c.h.b16 %v67
  %v317 = vunpack.c.l.b16 %v68
  %v318 = vunpack.c.h.b16 %v68
  %v319 = vunpack.c.l.b16 %v69
  %v320 = vunpack.c.h.b16 %v69
  %v321 = vunpack.c.l.b16 %v70
  %v322 = vunpack.c.h.b16 %v70
  %v323 = vunpack.c.l.b16 %v71
  %v324 = vunpack.c.l.b16 %v72
  %v325 = vunpack.c.h.b16 %v72
  %v326 = vunpack.c.l.b16 %v73
  %v327 = vunpack.c.h.b16 %v73
  %v328 = vunpack.c.l.b16 %v74
  %v329 = vunpack.c.h.b16 %v74
  %v330 = vunpack.c.l.b16 %v75
  %v331 = vunpack.c.h.b16 %v75
  %v332 = vunpack.c.l.b16 %v76
  %v333 = vunpack.c.h.b16 %v76
  %v334 = vunpack.c.l.b16 %v77
  %v335 = vunpack.c.h.b16 %v77
  %v336 = vunpack.c.l.b16 %v78
  %v337 = vunpack.c.h.b16 %v78
  %v338 = vunpack.c.l.b16 %v79
  %v339 = vunpack.c.h.b16 %v79
  %v340 = vunpack.c.l.b16 %v80
  %v341 = vunpack.c.h.b16 %v80
  %v342 = vunpack.c.l.b16 %v81
  %v343 = vunpack.c.h.b16 %v81
  %v344 = vunpack.c.l.b16 %v82
  %v345 = vunpack.c.h.b16 %v82
  %v346 = vunpack.c.l.b16 %v83
  %v347 = vunpack.c.h.b16 %v83
  %v348 = vunpack.c.l.b16 %v84
  %v349 = vunpack.c.l.b16 %v85
  %v350 = vunpack.c.h.b16 %v85
  %v351 = vunpack.c.l.b16 %v86
  %v352 = vunpack.c.h.b16 %v86
  %v353 = vunpack.c.l.b16 %v87
  %v354 = vunpack.c.h.b16 %v87
  %v355 = vunpack.c.l.b16 %v88
  %v356 = vunpack.c.h.b16 %v88
  %v357 = vunpack.c.l.b16 %v89
  %v358 = vunpack.c.h.b16 %v89
  %v359 = vunpack.c.l.b16 %v90
  %v360 = vunpack.c.h.b16 %v90
  %v361 = vunpack.c.l.b16 %v91
  %v362 = vunpack.c.h.b16 %v91
  %v363 = vunpack.c.l.b16 %v92
  %v364 = vunpack.c.h.b16 %v92
  %v365 = vunpack.c.l.b16 %v93
  %v366 = vunpack.c.h.b16 %v93
  %v367 = vunpack.c.l.b16 %v94
  %v368 = vunpack.c.h.b16 %v94
  %v369 = vunpack.c.l.b16 %v95
  %v370 = vunpack.c.h.b16 %v95
  %v371 = vunpack.c.l.b16 %v96
  %v372 = vunpack.c.h.b16 %v96
  %v373 = vunpack.c.l.b16 %v97
  %v374 = vunpack.c.l.b16 %v98
  %v375 = vunpack.c.h.b16 %v98
  %v376 = vunpack.c.l.b16 %v99
  %v377 = vunpack.c.h.b16 %v99
  %v378 = vunpack.c.l.b16 %v100
  %v379 = vunpack.c.h.b16 %v100
  %v380 = vunpack.c.l.b16 %v101
  %v381 = vunpack.c.h.b16 %v101
  %v382 = vunpack.c.l.b16 %v102
  %v383 = vunpack.c.h.b16 %v102
  %v384 = vunpack.c.l.b16 %v103
  %v385 = vunpack.c.h.b16 %v103
  %v386 = vunpack.c.l.b16 %v104
  %v387 = vunpack.c.h.b16 %v104
  %v388 = vunpack.c.l.b16 %v105
  %v389 = vunpack.c.h.b16 %v105
  %v390 = vunpack.c.l.b16 %v106
  %v391 = vunpack.c.h.b16 %v106
  %v392 = vunpack.c.l.b16 %v107
  %v393 = vunpack.c.h.b16 %v107
  %v394 = vunpack.c.l.b16 %v108
  %v395 = vunpack.c.h.b16 %v108
  %v396 = vunpack.c.l.b16 %v109
  %v397 = vunpack.c.h.b16 %v109
  %v398 = vunpack.c.l.b16 %v110
  %v399 = vunpack.c.l.b16 %v111
  %v400 = vunpack.c.h.b16 %v111
  %v401 = vunpack.c.l.b16 %v112
  %v402 = vunpack.c.h.b16 %v112
  %v403 = vunpack.c.l.b16 %v113
  %v404 = vunpack.c.h.b16 %v113
  %v405 = vunpack.c.l.b16 %v114
  %v406 = vunpack.c.h.b16 %v114
  %v407 = vunpack.c.l.b16 %v115
  %v408 = vunpack.c.h.b16 %v115
  %v409 = vunpack.c.l.b16 %v116
  %v410 = vunpack.c.h.b16 %v116
  %v411 = vunpack.c.l.b16 %v117
  %v412 = vunpack.c.h.b16 %v117
  %v413 = vunpack.c.l.b16 %v118
  %v414 = vunpack.c.h.b16 %v118
  %v415 = vunpack.c.l.b16 %v119
  %v416 = vunpack.c.h.b16 %v119
  %v417 = vunpack.c.l.b16 %v120
  %v418 = vunpack.c.h.b16 %v120
  %v419 = vunpack.c.l.b16 %v121
  %v420 = vunpack.c.h.b16 %v121
  %v421 = vunpack.c.l.b16 %v122
  %v422 = vunpack.c.h.b16 %v122
  %v423 = vunpack.c.l.b16 %v123
  %v424 = vpack.c.b16 %v274, %v249
  %v425 = vpack.c.b16 %v275, %v250
  %v426 = vpack.c.b16 %v276, %v251
  %v427 = vpack.c.b16 %v277, %v252
  %v428 = vpack.c.b16 %v278, %v253
  %v429 = vpack.c.b16 %v279, %v254
  %v430 = vpack.c.b16 %v280, %v255
  %v431 = vpack.c.b16 %v281, %v256
  %v432 = vpack.c.b16 %v282, %v257
  %v433 = vpack.c.b16 %v283, %v258
  %v434 = vpack.c.b16 %v284, %v259
  %v435 = vpack.c.b16 %v285, %v260
  %v436 = vpack.c.b16 %v286, %v261
  %v437 = vpack.c.b16 %v287, %v262
  %v438 = vpack.c.b16 %v288, %v263
  %v439 = vpack.c.b16 %v289, %v264
  %v440 = vpack.c.b16 %v290, %v265
  %v441 = vpack.c.b16 %v291, %v266
  %v442 = vpack.c.b16 %v292, %v267
  %v443 = vpack.c.b16 %v293, %v268
  %v444 = vpack.c.b16 %v294, %v269
  %v445 = vpack.c.b16 %v295, %v270
  %v446 = vpack.c.b16 %v296, %v271
  %v447 = vpack.c.b16 %v297, %v272
  %v448 = vpack.c.b16 %v298, %v273
  %v449 = vpack.c.b16 %v324, %v299
  %v450 = vpack.c.b16 %v325, %v300
  %v451 = vpack.c.b16 %v326, %v301
  %v452 = vpack.c.b16 %v327, %v302
  %v453 = vpack.c.b16 %v328, %v303
  %v454 = vpack.c.b16 %v329, %v304
  %v455 = vpack.c.b16 %v330, %v305
  %v456 = vpack.c.b16 %v331, %v306
  %v457 = vpack.c.b16 %v332, %v307
  %v458 = vpack.c.b16 %v333, %v308
  %v459 = vpack.c.b16 %v334, %v309
  %v460 = vpack.c.b16 %v335, %v310
  %v461 = vpack.c.b16 %v336, %v311
  %v462 = vpack.c.b16 %v337, %v312
  %v463 = vpack.c.b16 %v338, %v313
  %v464 = vpack.c.b16 %v339, %v314
  %v465 = vpack.c.b16 %v340, %v315
  %v466 = vpack.c.b16 %v341, %v316
  %v467 = vpack.c.b16 %v342, %v317
  %v468 = vpack.c.b16 %v343, %v318
  %v469 = vpack.c.b16 %v344, %v319
  %v470 = vpack.c.b16 %v345, %v320
  %v471 = vpack.c.b16 %v346, %v321
  %v472 = vpack.c.b16 %v347, %v322
  %v473 = vpack.c.b16 %v348, %v323
  %v474 = vpack.c.b16 %v374, %v349
  %v475 = vpack.c.b16 %v375, %v350
  %v476 = vpack.c.b16 %v376, %v351
  %v477 = vpack.c.b16 %v377, %v352
  %v478 = vpack.c.b16 %v378, %v353
  %v479 = vpack.c.b16 %v379, %v354
  %v480 = vpack.c.b16 %v380, %v355
  %v481 = vpack.c.b16 %v381, %v356
  %v482 = vpack.c.b16 %v382, %v357
  %v483 = vpack.c.b16 %v383, %v358
  %v484 = vpack.c.b16 %v384, %v359
  %v485 = vpack.c.b16 %v385, %v360
  %v486 = vpack.c.b16 %v386, %v361
  %v487 = vpack.c.b16 %v387, %v362
  %v488 = vpack.c.b16 %v388, %v363
  %v489 = vpack.c.b16 %v389, %v364
  %v490 = vpack.c.b16 %v390, %v365
  %v491 = vpack.c.b16 %v391, %v366
  %v492 = vpack.c.b16 %v392, %v367
  %v493 = vpack.c.b16 %v393, %v368
  %v494 = vpack.c.b16 %v394, %v369
  %v495 = vpack.c.b16 %v395, %v370
  %v496 = vpack.c.b16 %v396, %v371
  %v497 = vpack.c.b16 %v397, %v372
  %v498 = vpack.c.b16 %v398, %v373
  %v499 = vpack.c.b16 %v399, %v399
  %v500 = vpack.c.b16 %v400, %v400
  %v501 = vpack.c.b16 %v401, %v401
  %v502 = vpack.c.b16 %v402, %v402
  %v503 = vpack.c.b16 %v403, %v403
  %v504 = vpack.c.b16 %v404, %v404
  %v505 = vpack.c.b16 %v405, %v405
  %v506 = vpack.c.b16 %v406, %v406
  %v507 = vpack.c.b16 %v407, %v407
  %v508 = vpack.c.b16 %v408, %v408
  %v509 = vpack.c.b16 %v409, %v409
  %v510 = vpack.c.b16 %v410, %v410
  %v511 = vpack.c.b16 %v411, %v411
  %v512 = vpack.c.b16 %v412, %v412
  %v513 = vpack.c.b16 %v413, %v413
  %v514 = vpack.c.b16 %v414, %v414
  %v515 = vpack.c.b16 %v415, %v415
  %v516 = vpack.c.b16 %v416, %v416
  %v517 = vpack.c.b16 %v417, %v417
  %v518 = vpack.c.b16 %v418, %v418
  %v519 = vpack.c.b16 %v419, %v419
  %v520 = vpack.c.b16 %v420, %v420
  %v521 = vpack.c.b16 %v421, %v421
  %v522 = vpack.c.b16 %v422, %v422
  %v523 = vpack.c.b16 %v423, %v423
  %vm599 = vcmask 400384
  %v601 = vsel %vm599, %v156, 0
  %v604 = vsel %vm599, %v157, 0
  %vm606 = vcmask 1040384
  %v607 = vsel 0, 4294967295, 65535
  %v608 = vsel %vm606, %v607, 0
  %v610 = vand.u32 %v499, %v608
  %v613 = vand.u32 %v500, %v608
  %v616 = vand.u32 %v501, %v608
  %v619 = vand.u32 %v502, %v608
  %v622 = vand.u32 %v503, %v608
  %v625 = vand.u32 %v504, %v608
  %v628 = vand.u32 %v505, %v608
  %v631 = vand.u32 %v506, %v608
  %v634 = vand.u32 %v507, %v608
  %v637 = vand.u32 %v508, %v608
  %v640 = vand.u32 %v509, %v608
  %v643 = vand.u32 %v510, %v608
  %v646 = vand.u32 %v511, %v608
  %v649 = vand.u32 %v512, %v608
  %v652 = vand.u32 %v513, %v608
  %v655 = vand.u32 %v514, %v608
  %v658 = vand.u32 %v515, %v608
  %v661 = vand.u32 %v516, %v608
  %v664 = vand.u32 %v517, %v608
  %v667 = vand.u32 %v518, %v608
  %v670 = vand.u32 %v519, %v608
  %v673 = vand.u32 %v520, %v608
  %v676 = vand.u32 %v521, %v608
  %v679 = vand.u32 %v522, %v608
  %v682 = vand.u32 %v523, %v608
  %684 = vmatprep.subr.bf16.mxu0 0
  %685 = vmatpush1.bf16.msra.mxu0 0
  %686 = vmatprep.subr.bf16.mxu0 0
  %687 = vmatpush1.bf16.msra.mxu0 0
  %688 = vmatprep.subr.bf16.mxu0 0
  %689 = vmatpush1.bf16.msra.mxu0 0
  %690 = vmatprep.subr.bf16.mxu0 0
  %691 = vmatpush1.bf16.msra.mxu0 0
  %692 = vmatprep.subr.bf16.mxu0 %v613
  %693 = vmatpush1.bf16.msra.mxu0 %v610
  %694 = vmatprep.subr.bf16.mxu0 %v475
  %695 = vmatpush1.bf16.msra.mxu0 %v474
  %696 = vmatprep.subr.bf16.mxu0 %v450
  %697 = vmatpush1.bf16.msra.mxu0 %v449
  %698 = vmatprep.subr.bf16.mxu0 %v425
  %699 = vmatpush1.bf16.msra.mxu0 %v424
  %700 = vmatprep.subr.bf16.mxu0 0
  %701 = vmatpush2.bf16.msra.mxu0 0
  %702 = vmatprep.subr.bf16.mxu0 0
  %703 = vmatpush2.bf16.msra.mxu0 0
  %704 = vmatprep.subr.bf16.mxu0 0
  %705 = vmatpush2.bf16.msra.mxu0 0
  %706 = vmatprep.subr.bf16.mxu0 0
  %707 = vmatpush2.bf16.msra.mxu0 0
  %708 = vmatprep.subr.bf16.mxu0 0
  %709 = vmatpush2.bf16.msra.mxu0 0
  %710 = vmatprep.subr.bf16.mxu0 0
  %711 = vmatpush2.bf16.msra.mxu0 0
  %712 = vmatprep.subr.bf16.mxu0 0
  %713 = vmatpush2.bf16.msra.mxu0 0
  %714 = vmatprep.subr.bf16.mxu0 0
  %715 = vmatpush2.bf16.msra.mxu0 0
  %716 = vmatprep.mubr.bf16.mxu0 0
  %717 = vmatmul.mubr.bf16.gmra.mxu0 %v601
  %v718 = vpop.f32.mrf.mxu0
  %v719 = vadd.f32 %v131, %v718
  %v720 = vpop.f32.mrf.mxu0
  %v721 = vadd.f32 %v131, %v720
  %v722 = vpop.f32.mrf.mxu0
  %v723 = vadd.f32 %v136, %v722
  %v724 = vpop.f32.mrf.mxu0
  %v725 = vadd.f32 %v136, %v724
  %726 = vmatprep.mubr.bf16.mxu0 0
  %727 = vmatmul.mubr.bf16.gmra.mxu0 %v604
  %v728 = vpop.f32.mrf.mxu0
  %v729 = vadd.f32 %v141, %v728
  %v730 = vpop.f32.mrf.mxu0
  %v731 = vadd.f32 %v141, %v730
  %v732 = vpop.f32.mrf.mxu0
  %v733 = vadd.f32 %v146, %v732
  %v734 = vpop.f32.mrf.mxu0
  %v735 = vadd.f32 %v146, %v734
  %736 = vdwg.mxu0
  %737 = vmatprep.subr.bf16.mxu0 0
  %738 = vmatpush1.bf16.msra.mxu0 0
  %739 = vmatprep.subr.bf16.mxu0 0
  %740 = vmatpush1.bf16.msra.mxu0 0
  %741 = vmatprep.subr.bf16.mxu0 0
  %742 = vmatpush1.bf16.msra.mxu0 0
  %743 = vmatprep.subr.bf16.mxu0 0
  %744 = vmatpush1.bf16.msra.mxu0 0
  %745 = vmatprep.subr.bf16.mxu0 %v619
  %746 = vmatpush1.bf16.msra.mxu0 %v616
  %747 = vmatprep.subr.bf16.mxu0 %v477
  %748 = vmatpush1.bf16.msra.mxu0 %v476
  %749 = vmatprep.subr.bf16.mxu0 %v452
  %750 = vmatpush1.bf16.msra.mxu0 %v451
  %751 = vmatprep.subr.bf16.mxu0 %v427
  %752 = vmatpush1.bf16.msra.mxu0 %v426
  %753 = vmatprep.subr.bf16.mxu0 0
  %754 = vmatpush2.bf16.msra.mxu0 0
  %755 = vmatprep.subr.bf16.mxu0 0
  %756 = vmatpush2.bf16.msra.mxu0 0
  %757 = vmatprep.subr.bf16.mxu0 0
  %758 = vmatpush2.bf16.msra.mxu0 0
  %759 = vmatprep.subr.bf16.mxu0 0
  %760 = vmatpush2.bf16.msra.mxu0 0
  %761 = vmatprep.subr.bf16.mxu0 0
  %762 = vmatpush2.bf16.msra.mxu0 0
  %763 = vmatprep.subr.bf16.mxu0 0
  %764 = vmatpush2.bf16.msra.mxu0 0
  %765 = vmatprep.subr.bf16.mxu0 0
  %766 = vmatpush2.bf16.msra.mxu0 0
  %767 = vmatprep.subr.bf16.mxu0 0
  %768 = vmatpush2.bf16.msra.mxu0 0
  %769 = vmatprep.mubr.bf16.mxu0 0
  %770 = vmatmul.mubr.bf16.gmra.mxu0 %v601
  %v771 = vpop.f32.mrf.mxu0
  %v772 = vadd.f32 %v131, %v771
  %v773 = vpop.f32.mrf.mxu0
  %v774 = vadd.f32 %v131, %v773
  %v775 = vpop.f32.mrf.mxu0
  %v776 = vadd.f32 %v136, %v775
  %v777 = vpop.f32.mrf.mxu0
  %v778 = vadd.f32 %v136, %v777
  %779 = vmatprep.mubr.bf16.mxu0 0
  %780 = vmatmul.mubr.bf16.gmra.mxu0 %v604
  %v781 = vpop.f32.mrf.mxu0
  %v782 = vadd.f32 %v141, %v781
  %v783 = vpop.f32.mrf.mxu0
  %v784 = vadd.f32 %v141, %v783
  %v785 = vpop.f32.mrf.mxu0
  %v786 = vadd.f32 %v146, %v785
  %v787 = vpop.f32.mrf.mxu0
  %v788 = vadd.f32 %v146, %v787
  %789 = vdwg.mxu0
  %790 = vmatprep.subr.bf16.mxu0 0
  %791 = vmatpush1.bf16.msra.mxu0 0
  %792 = vmatprep.subr.bf16.mxu0 0
  %793 = vmatpush1.bf16.msra.mxu0 0
  %794 = vmatprep.subr.bf16.mxu0 0
  %795 = vmatpush1.bf16.msra.mxu0 0
  %796 = vmatprep.subr.bf16.mxu0 0
  %797 = vmatpush1.bf16.msra.mxu0 0
  %798 = vmatprep.subr.bf16.mxu0 %v625
  %799 = vmatpush1.bf16.msra.mxu0 %v622
  %800 = vmatprep.subr.bf16.mxu0 %v479
  %801 = vmatpush1.bf16.msra.mxu0 %v478
  %802 = vmatprep.subr.bf16.mxu0 %v454
  %803 = vmatpush1.bf16.msra.mxu0 %v453
  %804 = vmatprep.subr.bf16.mxu0 %v429
  %805 = vmatpush1.bf16.msra.mxu0 %v428
  %806 = vmatprep.subr.bf16.mxu0 0
  %807 = vmatpush2.bf16.msra.mxu0 0
  %808 = vmatprep.subr.bf16.mxu0 0
  %809 = vmatpush2.bf16.msra.mxu0 0
  %810 = vmatprep.subr.bf16.mxu0 0
  %811 = vmatpush2.bf16.msra.mxu0 0
  %812 = vmatprep.subr.bf16.mxu0 0
  %813 = vmatpush2.bf16.msra.mxu0 0
  %814 = vmatprep.subr.bf16.mxu0 0
  %815 = vmatpush2.bf16.msra.mxu0 0
  %816 = vmatprep.subr.bf16.mxu0 0
  %817 = vmatpush2.bf16.msra.mxu0 0
  %818 = vmatprep.subr.bf16.mxu0 0
  %819 = vmatpush2.bf16.msra.mxu0 0
  %820 = vmatprep.subr.bf16.mxu0 0
  %821 = vmatpush2.bf16.msra.mxu0 0
  %822 = vmatprep.mubr.bf16.mxu0 0
  %823 = vmatmul.mubr.bf16.gmra.mxu0 %v601
  %v824 = vpop.f32.mrf.mxu0
  %v825 = vadd.f32 %v131, %v824
  %v826 = vpop.f32.mrf.mxu0
  %v827 = vadd.f32 %v131, %v826
  %v828 = vpop.f32.mrf.mxu0
  %v829 = vadd.f32 %v136, %v828
  %v830 = vpop.f32.mrf.mxu0
  %v831 = vadd.f32 %v136, %v830
  %832 = vmatprep.mubr.bf16.mxu0 0
  %833 = vmatmul.mubr.bf16.gmra.mxu0 %v604
  %v834 = vpop.f32.mrf.mxu0
  %v835 = vadd.f32 %v141, %v834
  %v836 = vpop.f32.mrf.mxu0
  %v837 = vadd.f32 %v141, %v836
  %v838 = vpop.f32.mrf.mxu0
  %v839 = vadd.f32 %v146, %v838
  %v840 = vpop.f32.mrf.mxu0
  %v841 = vadd.f32 %v146, %v840
  %842 = vdwg.mxu0
  %843 = vmatprep.subr.bf16.mxu0 0
  %844 = vmatpush1.bf16.msra.mxu0 0
  %845 = vmatprep.subr.bf16.mxu0 0
  %846 = vmatpush1.bf16.msra.mxu0 0
  %847 = vmatprep.subr.bf16.mxu0 0
  %848 = vmatpush1.bf16.msra.mxu0 0
  %849 = vmatprep.subr.bf16.mxu0 0
  %850 = vmatpush1.bf16.msra.mxu0 0
  %851 = vmatprep.subr.bf16.mxu0 %v631
  %852 = vmatpush1.bf16.msra.mxu0 %v628
  %853 = vmatprep.subr.bf16.mxu0 %v481
  %854 = vmatpush1.bf16.msra.mxu0 %v480
  %855 = vmatprep.subr.bf16.mxu0 %v456
  %856 = vmatpush1.bf16.msra.mxu0 %v455
  %857 = vmatprep.subr.bf16.mxu0 %v431
  %858 = vmatpush1.bf16.msra.mxu0 %v430
  %859 = vmatprep.subr.bf16.mxu0 0
  %860 = vmatpush2.bf16.msra.mxu0 0
  %861 = vmatprep.subr.bf16.mxu0 0
  %862 = vmatpush2.bf16.msra.mxu0 0
  %863 = vmatprep.subr.bf16.mxu0 0
  %864 = vmatpush2.bf16.msra.mxu0 0
  %865 = vmatprep.subr.bf16.mxu0 0
  %866 = vmatpush2.bf16.msra.mxu0 0
  %867 = vmatprep.subr.bf16.mxu0 0
  %868 = vmatpush2.bf16.msra.mxu0 0
  %869 = vmatprep.subr.bf16.mxu0 0
  %870 = vmatpush2.bf16.msra.mxu0 0
  %871 = vmatprep.subr.bf16.mxu0 0
  %872 = vmatpush2.bf16.msra.mxu0 0
  %873 = vmatprep.subr.bf16.mxu0 0
  %874 = vmatpush2.bf16.msra.mxu0 0
  %875 = vmatprep.mubr.bf16.mxu0 0
  %876 = vmatmul.mubr.bf16.gmra.mxu0 %v601
  %v877 = vpop.f32.mrf.mxu0
  %v878 = vadd.f32 %v131, %v877
  %v879 = vpop.f32.mrf.mxu0
  %v880 = vadd.f32 %v131, %v879
  %v881 = vpop.f32.mrf.mxu0
  %v882 = vadd.f32 %v136, %v881
  %v883 = vpop.f32.mrf.mxu0
  %v884 = vadd.f32 %v136, %v883
  %885 = vmatprep.mubr.bf16.mxu0 0
  %886 = vmatmul.mubr.bf16.gmra.mxu0 %v604
  %v887 = vpop.f32.mrf.mxu0
  %v888 = vadd.f32 %v141, %v887
  %v889 = vpop.f32.mrf.mxu0
  %v890 = vadd.f32 %v141, %v889
  %v891 = vpop.f32.mrf.mxu0
  %v892 = vadd.f32 %v146, %v891
  %v893 = vpop.f32.mrf.mxu0
  %v894 = vadd.f32 %v146, %v893
  %895 = vdwg.mxu0
  %896 = vmatprep.subr.bf16.mxu0 0
  %897 = vmatpush1.bf16.msra.mxu0 0
  %898 = vmatprep.subr.bf16.mxu0 0
  %899 = vmatpush1.bf16.msra.mxu0 0
  %900 = vmatprep.subr.bf16.mxu0 0
  %901 = vmatpush1.bf16.msra.mxu0 0
  %902 = vmatprep.subr.bf16.mxu0 0
  %903 = vmatpush1.bf16.msra.mxu0 0
  %904 = vmatprep.subr.bf16.mxu0 %v637
  %905 = vmatpush1.bf16.msra.mxu0 %v634
  %906 = vmatprep.subr.bf16.mxu0 %v483
  %907 = vmatpush1.bf16.msra.mxu0 %v482
  %908 = vmatprep.subr.bf16.mxu0 %v458
  %909 = vmatpush1.bf16.msra.mxu0 %v457
  %910 = vmatprep.subr.bf16.mxu0 %v433
  %911 = vmatpush1.bf16.msra.mxu0 %v432
  %912 = vmatprep.subr.bf16.mxu0 0
  %913 = vmatpush2.bf16.msra.mxu0 0
  %914 = vmatprep.subr.bf16.mxu0 0
  %915 = vmatpush2.bf16.msra.mxu0 0
  %916 = vmatprep.subr.bf16.mxu0 0
  %917 = vmatpush2.bf16.msra.mxu0 0
  %918 = vmatprep.subr.bf16.mxu0 0
  %919 = vmatpush2.bf16.msra.mxu0 0
  %920 = vmatprep.subr.bf16.mxu0 0
  %921 = vmatpush2.bf16.msra.mxu0 0
  %922 = vmatprep.subr.bf16.mxu0 0
  %923 = vmatpush2.bf16.msra.mxu0 0
  %924 = vmatprep.subr.bf16.mxu0 0
  %925 = vmatpush2.bf16.msra.mxu0 0
  %926 = vmatprep.subr.bf16.mxu0 0
  %927 = vmatpush2.bf16.msra.mxu0 0
  %928 = vmatprep.mubr.bf16.mxu0 0
  %929 = vmatmul.mubr.bf16.gmra.mxu0 %v601
  %v930 = vpop.f32.mrf.mxu0
  %v931 = vadd.f32 %v131, %v930
  %v932 = vpop.f32.mrf.mxu0
  %v933 = vadd.f32 %v131, %v932
  %v934 = vpop.f32.mrf.mxu0
  %v935 = vadd.f32 %v136, %v934
  %v936 = vpop.f32.mrf.mxu0
  %v937 = vadd.f32 %v136, %v936
  %938 = vmatprep.mubr.bf16.mxu0 0
  %939 = vmatmul.mubr.bf16.gmra.mxu0 %v604
  %v940 = vpop.f32.mrf.mxu0
  %v941 = vadd.f32 %v141, %v940
  %v942 = vpop.f32.mrf.mxu0
  %v943 = vadd.f32 %v141, %v942
  %v944 = vpop.f32.mrf.mxu0
  %v945 = vadd.f32 %v146, %v944
  %v946 = vpop.f32.mrf.mxu0
  %v947 = vadd.f32 %v146, %v946
  %948 = vdwg.mxu0
  %949 = vmatprep.subr.bf16.mxu0 0
  %950 = vmatpush1.bf16.msra.mxu0 0
  %951 = vmatprep.subr.bf16.mxu0 0
  %952 = vmatpush1.bf16.msra.mxu0 0
  %953 = vmatprep.subr.bf16.mxu0 0
  %954 = vmatpush1.bf16.msra.mxu0 0
  %955 = vmatprep.subr.bf16.mxu0 0
  %956 = vmatpush1.bf16.msra.mxu0 0
  %957 = vmatprep.subr.bf16.mxu0 %v643
  %958 = vmatpush1.bf16.msra.mxu0 %v640
  %959 = vmatprep.subr.bf16.mxu0 %v485
  %960 = vmatpush1.bf16.msra.mxu0 %v484
  %961 = vmatprep.subr.bf16.mxu0 %v460
  %962 = vmatpush1.bf16.msra.mxu0 %v459
  %963 = vmatprep.subr.bf16.mxu0 %v435
  %964 = vmatpush1.bf16.msra.mxu0 %v434
  %965 = vmatprep.subr.bf16.mxu0 0
  %966 = vmatpush2.bf16.msra.mxu0 0
  %967 = vmatprep.subr.bf16.mxu0 0
  %968 = vmatpush2.bf16.msra.mxu0 0
  %969 = vmatprep.subr.bf16.mxu0 0
  %970 = vmatpush2.bf16.msra.mxu0 0
  %971 = vmatprep.subr.bf16.mxu0 0
  %972 = vmatpush2.bf16.msra.mxu0 0
  %973 = vmatprep.subr.bf16.mxu0 0
  %974 = vmatpush2.bf16.msra.mxu0 0
  %975 = vmatprep.subr.bf16.mxu0 0
  %976 = vmatpush2.bf16.msra.mxu0 0
  %977 = vmatprep.subr.bf16.mxu0 0
  %978 = vmatpush2.bf16.msra.mxu0 0
  %979 = vmatprep.subr.bf16.mxu0 0
  %980 = vmatpush2.bf16.msra.mxu0 0
  %981 = vmatprep.mubr.bf16.mxu0 0
  %982 = vmatmul.mubr.bf16.gmra.mxu0 %v601
  %v983 = vpop.f32.mrf.mxu0
  %v984 = vadd.f32 %v131, %v983
  %v985 = vpop.f32.mrf.mxu0
  %v986 = vadd.f32 %v131, %v985
  %v987 = vpop.f32.mrf.mxu0
  %v988 = vadd.f32 %v136, %v987
  %v989 = vpop.f32.mrf.mxu0
  %v990 = vadd.f32 %v136, %v989
  %991 = vmatprep.mubr.bf16.mxu0 0
  %992 = vmatmul.mubr.bf16.gmra.mxu0 %v604
  %v993 = vpop.f32.mrf.mxu0
  %v994 = vadd.f32 %v141, %v993
  %v995 = vpop.f32.mrf.mxu0
  %v996 = vadd.f32 %v141, %v995
  %v997 = vpop.f32.mrf.mxu0
  %v998 = vadd.f32 %v146, %v997
  %v999 = vpop.f32.mrf.mxu0
  %v1000 = vadd.f32 %v146, %v999
  %1001 = vdwg.mxu0
  %1002 = vmatprep.subr.bf16.mxu0 0
  %1003 = vmatpush1.bf16.msra.mxu0 0
  %1004 = vmatprep.subr.bf16.mxu0 0
  %1005 = vmatpush1.bf16.msra.mxu0 0
  %1006 = vmatprep.subr.bf16.mxu0 0
  %1007 = vmatpush1.bf16.msra.mxu0 0
  %1008 = vmatprep.subr.bf16.mxu0 0
  %1009 = vmatpush1.bf16.msra.mxu0 0
  %1010 = vmatprep.subr.bf16.mxu0 %v649
  %1011 = vmatpush1.bf16.msra.mxu0 %v646
  %1012 = vmatprep.subr.bf16.mxu0 %v487
  %1013 = vmatpush1.bf16.msra.mxu0 %v486
  %1014 = vmatprep.subr.bf16.mxu0 %v462
  %1015 = vmatpush1.bf16.msra.mxu0 %v461
  %1016 = vmatprep.subr.bf16.mxu0 %v437
  %1017 = vmatpush1.bf16.msra.mxu0 %v436
  %1018 = vmatprep.subr.bf16.mxu0 0
  %1019 = vmatpush2.bf16.msra.mxu0 0
  %1020 = vmatprep.subr.bf16.mxu0 0
  %1021 = vmatpush2.bf16.msra.mxu0 0
  %1022 = vmatprep.subr.bf16.mxu0 0
  %1023 = vmatpush2.bf16.msra.mxu0 0
  %1024 = vmatprep.subr.bf16.mxu0 0
  %1025 = vmatpush2.bf16.msra.mxu0 0
  %1026 = vmatprep.subr.bf16.mxu0 0
  %1027 = vmatpush2.bf16.msra.mxu0 0
  %1028 = vmatprep.subr.bf16.mxu0 0
  %1029 = vmatpush2.bf16.msra.mxu0 0
  %1030 = vmatprep.subr.bf16.mxu0 0
  %1031 = vmatpush2.bf16.msra.mxu0 0
  %1032 = vmatprep.subr.bf16.mxu0 0
  %1033 = vmatpush2.bf16.msra.mxu0 0
  %1034 = vmatprep.mubr.bf16.mxu0 0
  %1035 = vmatmul.mubr.bf16.gmra.mxu0 %v601
  %v1036 = vpop.f32.mrf.mxu0
  %v1037 = vadd.f32 %v131, %v1036
  %v1038 = vpop.f32.mrf.mxu0
  %v1039 = vadd.f32 %v131, %v1038
  %v1040 = vpop.f32.mrf.mxu0
  %v1041 = vadd.f32 %v136, %v1040
  %v1042 = vpop.f32.mrf.mxu0
  %v1043 = vadd.f32 %v136, %v1042
  %1044 = vmatprep.mubr.bf16.mxu0 0
  %1045 = vmatmul.mubr.bf16.gmra.mxu0 %v604
  %v1046 = vpop.f32.mrf.mxu0
  %v1047 = vadd.f32 %v141, %v1046
  %v1048 = vpop.f32.mrf.mxu0
  %v1049 = vadd.f32 %v141, %v1048
  %v1050 = vpop.f32.mrf.mxu0
  %v1051 = vadd.f32 %v146, %v1050
  %v1052 = vpop.f32.mrf.mxu0
  %v1053 = vadd.f32 %v146, %v1052
  %1054 = vdwg.mxu0
  %1055 = vmatprep.subr.bf16.mxu0 0
  %1056 = vmatpush1.bf16.msra.mxu0 0
  %1057 = vmatprep.subr.bf16.mxu0 0
  %1058 = vmatpush1.bf16.msra.mxu0 0
  %1059 = vmatprep.subr.bf16.mxu0 0
  %1060 = vmatpush1.bf16.msra.mxu0 0
  %1061 = vmatprep.subr.bf16.mxu0 0
  %1062 = vmatpush1.bf16.msra.mxu0 0
  %1063 = vmatprep.subr.bf16.mxu0 %v655
  %1064 = vmatpush1.bf16.msra.mxu0 %v652
  %1065 = vmatprep.subr.bf16.mxu0 %v489
  %1066 = vmatpush1.bf16.msra.mxu0 %v488
  %1067 = vmatprep.subr.bf16.mxu0 %v464
  %1068 = vmatpush1.bf16.msra.mxu0 %v463
  %1069 = vmatprep.subr.bf16.mxu0 %v439
  %1070 = vmatpush1.bf16.msra.mxu0 %v438
  %1071 = vmatprep.subr.bf16.mxu0 0
  %1072 = vmatpush2.bf16.msra.mxu0 0
  %1073 = vmatprep.subr.bf16.mxu0 0
  %1074 = vmatpush2.bf16.msra.mxu0 0
  %1075 = vmatprep.subr.bf16.mxu0 0
  %1076 = vmatpush2.bf16.msra.mxu0 0
  %1077 = vmatprep.subr.bf16.mxu0 0
  %1078 = vmatpush2.bf16.msra.mxu0 0
  %1079 = vmatprep.subr.bf16.mxu0 0
  %1080 = vmatpush2.bf16.msra.mxu0 0
  %1081 = vmatprep.subr.bf16.mxu0 0
  %1082 = vmatpush2.bf16.msra.mxu0 0
  %1083 = vmatprep.subr.bf16.mxu0 0
  %1084 = vmatpush2.bf16.msra.mxu0 0
  %1085 = vmatprep.subr.bf16.mxu0 0
  %1086 = vmatpush2.bf16.msra.mxu0 0
  %1087 = vmatprep.mubr.bf16.mxu0 0
  %1088 = vmatmul.mubr.bf16.gmra.mxu0 %v601
  %v1089 = vpop.f32.mrf.mxu0
  %v1090 = vadd.f32 %v131, %v1089
  %v1091 = vpop.f32.mrf.mxu0
  %v1092 = vadd.f32 %v131, %v1091
  %v1093 = vpop.f32.mrf.mxu0
  %v1094 = vadd.f32 %v136, %v1093
  %v1095 = vpop.f32.mrf.mxu0
  %v1096 = vadd.f32 %v136, %v1095
  %1097 = vmatprep.mubr.bf16.mxu0 0
  %1098 = vmatmul.mubr.bf16.gmra.mxu0 %v604
  %v1099 = vpop.f32.mrf.mxu0
  %v1100 = vadd.f32 %v141, %v1099
  %v1101 = vpop.f32.mrf.mxu0
  %v1102 = vadd.f32 %v141, %v1101
  %v1103 = vpop.f32.mrf.mxu0
  %v1104 = vadd.f32 %v146, %v1103
  %v1105 = vpop.f32.mrf.mxu0
  %v1106 = vadd.f32 %v146, %v1105
  %1107 = vdwg.mxu0
  %1108 = vmatprep.subr.bf16.mxu0 0
  %1109 = vmatpush1.bf16.msra.mxu0 0
  %1110 = vmatprep.subr.bf16.mxu0 0
  %1111 = vmatpush1.bf16.msra.mxu0 0
  %1112 = vmatprep.subr.bf16.mxu0 0
  %1113 = vmatpush1.bf16.msra.mxu0 0
  %1114 = vmatprep.subr.bf16.mxu0 0
  %1115 = vmatpush1.bf16.msra.mxu0 0
  %1116 = vmatprep.subr.bf16.mxu0 %v661
  %1117 = vmatpush1.bf16.msra.mxu0 %v658
  %1118 = vmatprep.subr.bf16.mxu0 %v491
  %1119 = vmatpush1.bf16.msra.mxu0 %v490
  %1120 = vmatprep.subr.bf16.mxu0 %v466
  %1121 = vmatpush1.bf16.msra.mxu0 %v465
  %1122 = vmatprep.subr.bf16.mxu0 %v441
  %1123 = vmatpush1.bf16.msra.mxu0 %v440
  %1124 = vmatprep.subr.bf16.mxu0 0
  %1125 = vmatpush2.bf16.msra.mxu0 0
  %1126 = vmatprep.subr.bf16.mxu0 0
  %1127 = vmatpush2.bf16.msra.mxu0 0
  %1128 = vmatprep.subr.bf16.mxu0 0
  %1129 = vmatpush2.bf16.msra.mxu0 0
  %1130 = vmatprep.subr.bf16.mxu0 0
  %1131 = vmatpush2.bf16.msra.mxu0 0
  %1132 = vmatprep.subr.bf16.mxu0 0
  %1133 = vmatpush2.bf16.msra.mxu0 0
  %1134 = vmatprep.subr.bf16.mxu0 0
  %1135 = vmatpush2.bf16.msra.mxu0 0
  %1136 = vmatprep.subr.bf16.mxu0 0
  %1137 = vmatpush2.bf16.msra.mxu0 0
  %1138 = vmatprep.subr.bf16.mxu0 0
  %1139 = vmatpush2.bf16.msra.mxu0 0
  %1140 = vmatprep.mubr.bf16.mxu0 0
  %1141 = vmatmul.mubr.bf16.gmra.mxu0 %v601
  %v1142 = vpop.f32.mrf.mxu0
  %v1143 = vadd.f32 %v131, %v1142
  %v1144 = vpop.f32.mrf.mxu0
  %v1145 = vadd.f32 %v131, %v1144
  %v1146 = vpop.f32.mrf.mxu0
  %v1147 = vadd.f32 %v136, %v1146
  %v1148 = vpop.f32.mrf.mxu0
  %v1149 = vadd.f32 %v136, %v1148
  %1150 = vmatprep.mubr.bf16.mxu0 0
  %1151 = vmatmul.mubr.bf16.gmra.mxu0 %v604
  %v1152 = vpop.f32.mrf.mxu0
  %v1153 = vadd.f32 %v141, %v1152
  %v1154 = vpop.f32.mrf.mxu0
  %v1155 = vadd.f32 %v141, %v1154
  %v1156 = vpop.f32.mrf.mxu0
  %v1157 = vadd.f32 %v146, %v1156
  %v1158 = vpop.f32.mrf.mxu0
  %v1159 = vadd.f32 %v146, %v1158
  %1160 = vdwg.mxu0
  %1161 = vmatprep.subr.bf16.mxu0 0
  %1162 = vmatpush1.bf16.msra.mxu0 0
  %1163 = vmatprep.subr.bf16.mxu0 0
  %1164 = vmatpush1.bf16.msra.mxu0 0
  %1165 = vmatprep.subr.bf16.mxu0 0
  %1166 = vmatpush1.bf16.msra.mxu0 0
  %1167 = vmatprep.subr.bf16.mxu0 0
  %1168 = vmatpush1.bf16.msra.mxu0 0
  %1169 = vmatprep.subr.bf16.mxu0 %v667
  %1170 = vmatpush1.bf16.msra.mxu0 %v664
  %1171 = vmatprep.subr.bf16.mxu0 %v493
  %1172 = vmatpush1.bf16.msra.mxu0 %v492
  %1173 = vmatprep.subr.bf16.mxu0 %v468
  %1174 = vmatpush1.bf16.msra.mxu0 %v467
  %1175 = vmatprep.subr.bf16.mxu0 %v443
  %1176 = vmatpush1.bf16.msra.mxu0 %v442
  %1177 = vmatprep.subr.bf16.mxu0 0
  %1178 = vmatpush2.bf16.msra.mxu0 0
  %1179 = vmatprep.subr.bf16.mxu0 0
  %1180 = vmatpush2.bf16.msra.mxu0 0
  %1181 = vmatprep.subr.bf16.mxu0 0
  %1182 = vmatpush2.bf16.msra.mxu0 0
  %1183 = vmatprep.subr.bf16.mxu0 0
  %1184 = vmatpush2.bf16.msra.mxu0 0
  %1185 = vmatprep.subr.bf16.mxu0 0
  %1186 = vmatpush2.bf16.msra.mxu0 0
  %1187 = vmatprep.subr.bf16.mxu0 0
  %1188 = vmatpush2.bf16.msra.mxu0 0
  %1189 = vmatprep.subr.bf16.mxu0 0
  %1190 = vmatpush2.bf16.msra.mxu0 0
  %1191 = vmatprep.subr.bf16.mxu0 0
  %1192 = vmatpush2.bf16.msra.mxu0 0
  %1193 = vmatprep.mubr.bf16.mxu0 0
  %1194 = vmatmul.mubr.bf16.gmra.mxu0 %v601
  %v1195 = vpop.f32.mrf.mxu0
  %v1196 = vadd.f32 %v131, %v1195
  %v1197 = vpop.f32.mrf.mxu0
  %v1198 = vadd.f32 %v131, %v1197
  %v1199 = vpop.f32.mrf.mxu0
  %v1200 = vadd.f32 %v136, %v1199
  %v1201 = vpop.f32.mrf.mxu0
  %v1202 = vadd.f32 %v136, %v1201
  %1203 = vmatprep.mubr.bf16.mxu0 0
  %1204 = vmatmul.mubr.bf16.gmra.mxu0 %v604
  %v1205 = vpop.f32.mrf.mxu0
  %v1206 = vadd.f32 %v141, %v1205
  %v1207 = vpop.f32.mrf.mxu0
  %v1208 = vadd.f32 %v141, %v1207
  %v1209 = vpop.f32.mrf.mxu0
  %v1210 = vadd.f32 %v146, %v1209
  %v1211 = vpop.f32.mrf.mxu0
  %v1212 = vadd.f32 %v146, %v1211
  %1213 = vdwg.mxu0
  %1214 = vmatprep.subr.bf16.mxu0 0
  %1215 = vmatpush1.bf16.msra.mxu0 0
  %1216 = vmatprep.subr.bf16.mxu0 0
  %1217 = vmatpush1.bf16.msra.mxu0 0
  %1218 = vmatprep.subr.bf16.mxu0 0
  %1219 = vmatpush1.bf16.msra.mxu0 0
  %1220 = vmatprep.subr.bf16.mxu0 0
  %1221 = vmatpush1.bf16.msra.mxu0 0
  %1222 = vmatprep.subr.bf16.mxu0 %v673
  %1223 = vmatpush1.bf16.msra.mxu0 %v670
  %1224 = vmatprep.subr.bf16.mxu0 %v495
  %1225 = vmatpush1.bf16.msra.mxu0 %v494
  %1226 = vmatprep.subr.bf16.mxu0 %v470
  %1227 = vmatpush1.bf16.msra.mxu0 %v469
  %1228 = vmatprep.subr.bf16.mxu0 %v445
  %1229 = vmatpush1.bf16.msra.mxu0 %v444
  %1230 = vmatprep.subr.bf16.mxu0 0
  %1231 = vmatpush2.bf16.msra.mxu0 0
  %1232 = vmatprep.subr.bf16.mxu0 0
  %1233 = vmatpush2.bf16.msra.mxu0 0
  %1234 = vmatprep.subr.bf16.mxu0 0
  %1235 = vmatpush2.bf16.msra.mxu0 0
  %1236 = vmatprep.subr.bf16.mxu0 0
  %1237 = vmatpush2.bf16.msra.mxu0 0
  %1238 = vmatprep.subr.bf16.mxu0 0
  %1239 = vmatpush2.bf16.msra.mxu0 0
  %1240 = vmatprep.subr.bf16.mxu0 0
  %1241 = vmatpush2.bf16.msra.mxu0 0
  %1242 = vmatprep.subr.bf16.mxu0 0
  %1243 = vmatpush2.bf16.msra.mxu0 0
  %1244 = vmatprep.subr.bf16.mxu0 0
  %1245 = vmatpush2.bf16.msra.mxu0 0
  %1246 = vmatprep.mubr.bf16.mxu0 0
  %1247 = vmatmul.mubr.bf16.gmra.mxu0 %v601
  %v1248 = vpop.f32.mrf.mxu0
  %v1249 = vadd.f32 %v131, %v1248
  %v1250 = vpop.f32.mrf.mxu0
  %v1251 = vadd.f32 %v131, %v1250
  %v1252 = vpop.f32.mrf.mxu0
  %v1253 = vadd.f32 %v136, %v1252
  %v1254 = vpop.f32.mrf.mxu0
  %v1255 = vadd.f32 %v136, %v1254
  %1256 = vmatprep.mubr.bf16.mxu0 0
  %1257 = vmatmul.mubr.bf16.gmra.mxu0 %v604
  %v1258 = vpop.f32.mrf.mxu0
  %v1259 = vadd.f32 %v141, %v1258
  %v1260 = vpop.f32.mrf.mxu0
  %v1261 = vadd.f32 %v141, %v1260
  %v1262 = vpop.f32.mrf.mxu0
  %v1263 = vadd.f32 %v146, %v1262
  %v1264 = vpop.f32.mrf.mxu0
  %v1265 = vadd.f32 %v146, %v1264
  %1266 = vdwg.mxu0
  %1267 = vmatprep.subr.bf16.mxu0 0
  %1268 = vmatpush1.bf16.msra.mxu0 0
  %1269 = vmatprep.subr.bf16.mxu0 0
  %1270 = vmatpush1.bf16.msra.mxu0 0
  %1271 = vmatprep.subr.bf16.mxu0 0
  %1272 = vmatpush1.bf16.msra.mxu0 0
  %1273 = vmatprep.subr.bf16.mxu0 0
  %1274 = vmatpush1.bf16.msra.mxu0 0
  %1275 = vmatprep.subr.bf16.mxu0 %v679
  %1276 = vmatpush1.bf16.msra.mxu0 %v676
  %1277 = vmatprep.subr.bf16.mxu0 %v497
  %1278 = vmatpush1.bf16.msra.mxu0 %v496
  %1279 = vmatprep.subr.bf16.mxu0 %v472
  %1280 = vmatpush1.bf16.msra.mxu0 %v471
  %1281 = vmatprep.subr.bf16.mxu0 %v447
  %1282 = vmatpush1.bf16.msra.mxu0 %v446
  %1283 = vmatprep.subr.bf16.mxu0 0
  %1284 = vmatpush2.bf16.msra.mxu0 0
  %1285 = vmatprep.subr.bf16.mxu0 0
  %1286 = vmatpush2.bf16.msra.mxu0 0
  %1287 = vmatprep.subr.bf16.mxu0 0
  %1288 = vmatpush2.bf16.msra.mxu0 0
  %1289 = vmatprep.subr.bf16.mxu0 0
  %1290 = vmatpush2.bf16.msra.mxu0 0
  %1291 = vmatprep.subr.bf16.mxu0 0
  %1292 = vmatpush2.bf16.msra.mxu0 0
  %1293 = vmatprep.subr.bf16.mxu0 0
  %1294 = vmatpush2.bf16.msra.mxu0 0
  %1295 = vmatprep.subr.bf16.mxu0 0
  %1296 = vmatpush2.bf16.msra.mxu0 0
  %1297 = vmatprep.subr.bf16.mxu0 0
  %1298 = vmatpush2.bf16.msra.mxu0 0
  %1299 = vmatprep.mubr.bf16.mxu0 0
  %1300 = vmatmul.mubr.bf16.gmra.mxu0 %v601
  %v1301 = vpop.f32.mrf.mxu0
  %v1302 = vadd.f32 %v131, %v1301
  %v1303 = vpop.f32.mrf.mxu0
  %v1304 = vadd.f32 %v131, %v1303
  %v1305 = vpop.f32.mrf.mxu0
  %v1306 = vadd.f32 %v136, %v1305
  %v1307 = vpop.f32.mrf.mxu0
  %v1308 = vadd.f32 %v136, %v1307
  %1309 = vmatprep.mubr.bf16.mxu0 0
  %1310 = vmatmul.mubr.bf16.gmra.mxu0 %v604
  %v1311 = vpop.f32.mrf.mxu0
  %v1312 = vadd.f32 %v141, %v1311
  %v1313 = vpop.f32.mrf.mxu0
  %v1314 = vadd.f32 %v141, %v1313
  %v1315 = vpop.f32.mrf.mxu0
  %v1316 = vadd.f32 %v146, %v1315
  %v1317 = vpop.f32.mrf.mxu0
  %v1318 = vadd.f32 %v146, %v1317
  %1319 = vdwg.mxu0
  %1320 = vmatprep.subr.bf16.mxu0 0
  %1321 = vmatpush1.bf16.msra.mxu0 0
  %1322 = vmatprep.subr.bf16.mxu0 0
  %1323 = vmatpush1.bf16.msra.mxu0 0
  %1324 = vmatprep.subr.bf16.mxu0 0
  %1325 = vmatpush1.bf16.msra.mxu0 0
  %1326 = vmatprep.subr.bf16.mxu0 0
  %1327 = vmatpush1.bf16.msra.mxu0 0
  %1328 = vmatprep.subr.bf16.mxu0 0
  %1329 = vmatpush1.bf16.msra.mxu0 %v682
  %1330 = vmatprep.subr.bf16.mxu0 0
  %1331 = vmatpush1.bf16.msra.mxu0 %v498
  %1332 = vmatprep.subr.bf16.mxu0 0
  %1333 = vmatpush1.bf16.msra.mxu0 %v473
  %1334 = vmatprep.subr.bf16.mxu0 0
  %1335 = vmatpush1.bf16.msra.mxu0 %v448
  %1336 = vmatprep.subr.bf16.mxu0 0
  %1337 = vmatpush2.bf16.msra.mxu0 0
  %1338 = vmatprep.subr.bf16.mxu0 0
  %1339 = vmatpush2.bf16.msra.mxu0 0
  %1340 = vmatprep.subr.bf16.mxu0 0
  %1341 = vmatpush2.bf16.msra.mxu0 0
  %1342 = vmatprep.subr.bf16.mxu0 0
  %1343 = vmatpush2.bf16.msra.mxu0 0
  %1344 = vmatprep.subr.bf16.mxu0 0
  %1345 = vmatpush2.bf16.msra.mxu0 0
  %1346 = vmatprep.subr.bf16.mxu0 0
  %1347 = vmatpush2.bf16.msra.mxu0 0
  %1348 = vmatprep.subr.bf16.mxu0 0
  %1349 = vmatpush2.bf16.msra.mxu0 0
  %1350 = vmatprep.subr.bf16.mxu0 0
  %1351 = vmatpush2.bf16.msra.mxu0 0
  %1352 = vmatprep.mubr.bf16.mxu0 0
  %1353 = vmatmul.mubr.bf16.gmra.mxu0 %v601
  %v1354 = vpop.f32.mrf.mxu0
  %v1355 = vadd.f32 %v131, %v1354
  %v1356 = vpop.f32.mrf.mxu0
  %v1357 = vpop.f32.mrf.mxu0
  %v1358 = vadd.f32 %v136, %v1357
  %v1359 = vpop.f32.mrf.mxu0
  %1360 = vmatprep.mubr.bf16.mxu0 0
  %1361 = vmatmul.mubr.bf16.gmra.mxu0 %v604
  %v1362 = vpop.f32.mrf.mxu0
  %v1363 = vadd.f32 %v141, %v1362
  %v1364 = vpop.f32.mrf.mxu0
  %v1365 = vpop.f32.mrf.mxu0
  %v1366 = vadd.f32 %v146, %v1365
  %v1367 = vpop.f32.mrf.mxu0
  %1368 = vdwg.mxu0
  %v1369 = vmul.f32 %v719, 0.2
  %v1370 = vmul.f32 %v721, 0.2
  %v1371 = vmul.f32 %v772, 0.2
  %v1372 = vmul.f32 %v774, 0.2
  %v1373 = vmul.f32 %v825, 0.2
  %v1374 = vmul.f32 %v827, 0.2
  %v1375 = vmul.f32 %v878, 0.2
  %v1376 = vmul.f32 %v880, 0.2
  %v1377 = vmul.f32 %v931, 0.2
  %v1378 = vmul.f32 %v933, 0.2
  %v1379 = vmul.f32 %v984, 0.2
  %v1380 = vmul.f32 %v986, 0.2
  %v1381 = vmul.f32 %v1037, 0.2
  %v1382 = vmul.f32 %v1039, 0.2
  %v1383 = vmul.f32 %v1090, 0.2
  %v1384 = vmul.f32 %v1092, 0.2
  %v1385 = vmul.f32 %v1143, 0.2
  %v1386 = vmul.f32 %v1145, 0.2
  %v1387 = vmul.f32 %v1196, 0.2
  %v1388 = vmul.f32 %v1198, 0.2
  %v1389 = vmul.f32 %v1249, 0.2
  %v1390 = vmul.f32 %v1251, 0.2
  %v1391 = vmul.f32 %v1302, 0.2
  %v1392 = vmul.f32 %v1304, 0.2
  %v1393 = vmul.f32 %v1355, 0.2
  %v1394 = vmul.f32 %v723, 0.2
  %v1395 = vmul.f32 %v725, 0.2
  %v1396 = vmul.f32 %v776, 0.2
  %v1397 = vmul.f32 %v778, 0.2
  %v1398 = vmul.f32 %v829, 0.2
  %v1399 = vmul.f32 %v831, 0.2
  %v1400 = vmul.f32 %v882, 0.2
  %v1401 = vmul.f32 %v884, 0.2
  %v1402 = vmul.f32 %v935, 0.2
  %v1403 = vmul.f32 %v937, 0.2
  %v1404 = vmul.f32 %v988, 0.2
  %v1405 = vmul.f32 %v990, 0.2
  %v1406 = vmul.f32 %v1041, 0.2
  %v1407 = vmul.f32 %v1043, 0.2
  %v1408 = vmul.f32 %v1094, 0.2
  %v1409 = vmul.f32 %v1096, 0.2
  %v1410 = vmul.f32 %v1147, 0.2
  %v1411 = vmul.f32 %v1149, 0.2
  %v1412 = vmul.f32 %v1200, 0.2
  %v1413 = vmul.f32 %v1202, 0.2
  %v1414 = vmul.f32 %v1253, 0.2
  %v1415 = vmul.f32 %v1255, 0.2
  %v1416 = vmul.f32 %v1306, 0.2
  %v1417 = vmul.f32 %v1308, 0.2
  %v1418 = vmul.f32 %v1358, 0.2
  %v1419 = vmul.f32 %v729, 0.2
  %v1420 = vmul.f32 %v731, 0.2
  %v1421 = vmul.f32 %v782, 0.2
  %v1422 = vmul.f32 %v784, 0.2
  %v1423 = vmul.f32 %v835, 0.2
  %v1424 = vmul.f32 %v837, 0.2
  %v1425 = vmul.f32 %v888, 0.2
  %v1426 = vmul.f32 %v890, 0.2
  %v1427 = vmul.f32 %v941, 0.2
  %v1428 = vmul.f32 %v943, 0.2
  %v1429 = vmul.f32 %v994, 0.2
  %v1430 = vmul.f32 %v996, 0.2
  %v1431 = vmul.f32 %v1047, 0.2
  %v1432 = vmul.f32 %v1049, 0.2
  %v1433 = vmul.f32 %v1100, 0.2
  %v1434 = vmul.f32 %v1102, 0.2
  %v1435 = vmul.f32 %v1153, 0.2
  %v1436 = vmul.f32 %v1155, 0.2
  %v1437 = vmul.f32 %v1206, 0.2
  %v1438 = vmul.f32 %v1208, 0.2
  %v1439 = vmul.f32 %v1259, 0.2
  %v1440 = vmul.f32 %v1261, 0.2
  %v1441 = vmul.f32 %v1312, 0.2
  %v1442 = vmul.f32 %v1314, 0.2
  %v1443 = vmul.f32 %v1363, 0.2
  %v1444 = vmul.f32 %v733, 0.2
  %v1445 = vmul.f32 %v735, 0.2
  %v1446 = vmul.f32 %v786, 0.2
  %v1447 = vmul.f32 %v788, 0.2
  %v1448 = vmul.f32 %v839, 0.2
  %v1449 = vmul.f32 %v841, 0.2
  %v1450 = vmul.f32 %v892, 0.2
  %v1451 = vmul.f32 %v894, 0.2
  %v1452 = vmul.f32 %v945, 0.2
  %v1453 = vmul.f32 %v947, 0.2
  %v1454 = vmul.f32 %v998, 0.2
  %v1455 = vmul.f32 %v1000, 0.2
  %v1456 = vmul.f32 %v1051, 0.2
  %v1457 = vmul.f32 %v1053, 0.2
  %v1458 = vmul.f32 %v1104, 0.2
  %v1459 = vmul.f32 %v1106, 0.2
  %v1460 = vmul.f32 %v1157, 0.2
  %v1461 = vmul.f32 %v1159, 0.2
  %v1462 = vmul.f32 %v1210, 0.2
  %v1463 = vmul.f32 %v1212, 0.2
  %v1464 = vmul.f32 %v1263, 0.2
  %v1465 = vmul.f32 %v1265, 0.2
  %v1466 = vmul.f32 %v1316, 0.2
  %v1467 = vmul.f32 %v1318, 0.2
  %v1468 = vmul.f32 %v1366, 0.2
  %v1469 = vmax.f32 %v719, %v1369
  %v1470 = vmax.f32 %v721, %v1370
  %v1471 = vmax.f32 %v772, %v1371
  %v1472 = vmax.f32 %v774, %v1372
  %v1473 = vmax.f32 %v825, %v1373
  %v1474 = vmax.f32 %v827, %v1374
  %v1475 = vmax.f32 %v878, %v1375
  %v1476 = vmax.f32 %v880, %v1376
  %v1477 = vmax.f32 %v931, %v1377
  %v1478 = vmax.f32 %v933, %v1378
  %v1479 = vmax.f32 %v984, %v1379
  %v1480 = vmax.f32 %v986, %v1380
  %v1481 = vmax.f32 %v1037, %v1381
  %v1482 = vmax.f32 %v1039, %v1382
  %v1483 = vmax.f32 %v1090, %v1383
  %v1484 = vmax.f32 %v1092, %v1384
  %v1485 = vmax.f32 %v1143, %v1385
  %v1486 = vmax.f32 %v1145, %v1386
  %v1487 = vmax.f32 %v1196, %v1387
  %v1488 = vmax.f32 %v1198, %v1388
  %v1489 = vmax.f32 %v1249, %v1389
  %v1490 = vmax.f32 %v1251, %v1390
  %v1491 = vmax.f32 %v1302, %v1391
  %v1492 = vmax.f32 %v1304, %v1392
  %v1493 = vmax.f32 %v1355, %v1393
  %v1494 = vmax.f32 %v723, %v1394
  %v1495 = vmax.f32 %v725, %v1395
  %v1496 = vmax.f32 %v776, %v1396
  %v1497 = vmax.f32 %v778, %v1397
  %v1498 = vmax.f32 %v829, %v1398
  %v1499 = vmax.f32 %v831, %v1399
  %v1500 = vmax.f32 %v882, %v1400
  %v1501 = vmax.f32 %v884, %v1401
  %v1502 = vmax.f32 %v935, %v1402
  %v1503 = vmax.f32 %v937, %v1403
  %v1504 = vmax.f32 %v988, %v1404
  %v1505 = vmax.f32 %v990, %v1405
  %v1506 = vmax.f32 %v1041, %v1406
  %v1507 = vmax.f32 %v1043, %v1407
  %v1508 = vmax.f32 %v1094, %v1408
  %v1509 = vmax.f32 %v1096, %v1409
  %v1510 = vmax.f32 %v1147, %v1410
  %v1511 = vmax.f32 %v1149, %v1411
  %v1512 = vmax.f32 %v1200, %v1412
  %v1513 = vmax.f32 %v1202, %v1413
  %v1514 = vmax.f32 %v1253, %v1414
  %v1515 = vmax.f32 %v1255, %v1415
  %v1516 = vmax.f32 %v1306, %v1416
  %v1517 = vmax.f32 %v1308, %v1417
  %v1518 = vmax.f32 %v1358, %v1418
  %v1519 = vmax.f32 %v729, %v1419
  %v1520 = vmax.f32 %v731, %v1420
  %v1521 = vmax.f32 %v782, %v1421
  %v1522 = vmax.f32 %v784, %v1422
  %v1523 = vmax.f32 %v835, %v1423
  %v1524 = vmax.f32 %v837, %v1424
  %v1525 = vmax.f32 %v888, %v1425
  %v1526 = vmax.f32 %v890, %v1426
  %v1527 = vmax.f32 %v941, %v1427
  %v1528 = vmax.f32 %v943, %v1428
  %v1529 = vmax.f32 %v994, %v1429
  %v1530 = vmax.f32 %v996, %v1430
  %v1531 = vmax.f32 %v1047, %v1431
  %v1532 = vmax.f32 %v1049, %v1432
  %v1533 = vmax.f32 %v1100, %v1433
  %v1534 = vmax.f32 %v1102, %v1434
  %v1535 = vmax.f32 %v1153, %v1435
  %v1536 = vmax.f32 %v1155, %v1436
  %v1537 = vmax.f32 %v1206, %v1437
  %v1538 = vmax.f32 %v1208, %v1438
  %v1539 = vmax.f32 %v1259, %v1439
  %v1540 = vmax.f32 %v1261, %v1440
  %v1541 = vmax.f32 %v1312, %v1441
  %v1542 = vmax.f32 %v1314, %v1442
  %v1543 = vmax.f32 %v1363, %v1443
  %v1544 = vmax.f32 %v733, %v1444
  %v1545 = vmax.f32 %v735, %v1445
  %v1546 = vmax.f32 %v786, %v1446
  %v1547 = vmax.f32 %v788, %v1447
  %v1548 = vmax.f32 %v839, %v1448
  %v1549 = vmax.f32 %v841, %v1449
  %v1550 = vmax.f32 %v892, %v1450
  %v1551 = vmax.f32 %v894, %v1451
  %v1552 = vmax.f32 %v945, %v1452
  %v1553 = vmax.f32 %v947, %v1453
  %v1554 = vmax.f32 %v998, %v1454
  %v1555 = vmax.f32 %v1000, %v1455
  %v1556 = vmax.f32 %v1051, %v1456
  %v1557 = vmax.f32 %v1053, %v1457
  %v1558 = vmax.f32 %v1104, %v1458
  %v1559 = vmax.f32 %v1106, %v1459
  %v1560 = vmax.f32 %v1157, %v1460
  %v1561 = vmax.f32 %v1159, %v1461
  %v1562 = vmax.f32 %v1210, %v1462
  %v1563 = vmax.f32 %v1212, %v1463
  %v1564 = vmax.f32 %v1263, %v1464
  %v1565 = vmax.f32 %v1265, %v1465
  %v1566 = vmax.f32 %v1316, %v1466
  %v1567 = vmax.f32 %v1318, %v1467
  %v1568 = vmax.f32 %v1366, %v1468
  %v1569 = vpack.c.bf16 %v1494, %v1469
  %v1570 = vpack.c.bf16 %v1495, %v1470
  %v1571 = vpack.c.bf16 %v1496, %v1471
  %v1572 = vpack.c.bf16 %v1497, %v1472
  %v1573 = vpack.c.bf16 %v1498, %v1473
  %v1574 = vpack.c.bf16 %v1499, %v1474
  %v1575 = vpack.c.bf16 %v1500, %v1475
  %v1576 = vpack.c.bf16 %v1501, %v1476
  %v1577 = vpack.c.bf16 %v1502, %v1477
  %v1578 = vpack.c.bf16 %v1503, %v1478
  %v1579 = vpack.c.bf16 %v1504, %v1479
  %v1580 = vpack.c.bf16 %v1505, %v1480
  %v1581 = vpack.c.bf16 %v1506, %v1481
  %v1582 = vpack.c.bf16 %v1507, %v1482
  %v1583 = vpack.c.bf16 %v1508, %v1483
  %v1584 = vpack.c.bf16 %v1509, %v1484
  %v1585 = vpack.c.bf16 %v1510, %v1485
  %v1586 = vpack.c.bf16 %v1511, %v1486
  %v1587 = vpack.c.bf16 %v1512, %v1487
  %v1588 = vpack.c.bf16 %v1513, %v1488
  %v1589 = vpack.c.bf16 %v1514, %v1489
  %v1590 = vpack.c.bf16 %v1515, %v1490
  %v1591 = vpack.c.bf16 %v1516, %v1491
  %v1592 = vpack.c.bf16 %v1517, %v1492
  %v1593 = vpack.c.bf16 %v1518, %v1493
  %v1594 = vpack.c.bf16 %v1544, %v1519
  %v1595 = vpack.c.bf16 %v1545, %v1520
  %v1596 = vpack.c.bf16 %v1546, %v1521
  %v1597 = vpack.c.bf16 %v1547, %v1522
  %v1598 = vpack.c.bf16 %v1548, %v1523
  %v1599 = vpack.c.bf16 %v1549, %v1524
  %v1600 = vpack.c.bf16 %v1550, %v1525
  %v1601 = vpack.c.bf16 %v1551, %v1526
  %v1602 = vpack.c.bf16 %v1552, %v1527
  %v1603 = vpack.c.bf16 %v1553, %v1528
  %v1604 = vpack.c.bf16 %v1554, %v1529
  %v1605 = vpack.c.bf16 %v1555, %v1530
  %v1606 = vpack.c.bf16 %v1556, %v1531
  %v1607 = vpack.c.bf16 %v1557, %v1532
  %v1608 = vpack.c.bf16 %v1558, %v1533
  %v1609 = vpack.c.bf16 %v1559, %v1534
  %v1610 = vpack.c.bf16 %v1560, %v1535
  %v1611 = vpack.c.bf16 %v1561, %v1536
  %v1612 = vpack.c.bf16 %v1562, %v1537
  %v1613 = vpack.c.bf16 %v1563, %v1538
  %v1614 = vpack.c.bf16 %v1564, %v1539
  %v1615 = vpack.c.bf16 %v1565, %v1540
  %v1616 = vpack.c.bf16 %v1566, %v1541
  %v1617 = vpack.c.bf16 %v1567, %v1542
  %v1618 = vpack.c.bf16 %v1568, %v1543
  %v1621 = vunpack.c.l.b16 %v1569
  %v1622 = vunpack.c.h.b16 %v1569
  %v1623 = vunpack.c.l.b16 %v1594
  %v1624 = vunpack.c.h.b16 %v1594
  %v1625 = vpack.c.b16 %v1621, %v1621
  %v1626 = vpack.c.b16 %v1622, %v1622
  %v1627 = vpack.c.b16 %v1623, %v1623
  %v1628 = vpack.c.b16 %v1624, %v1624
  %1633 = vst [vmem:[#allocation2] sm:$0xf] %v1625
  %1634 = vst [vmem:[#allocation2 + $0x4] sm:$0xf] %v1626
  %1635 = vst [vmem:[#allocation2 + $0x8] sm:$0xf] %v1627
  %1636 = vst [vmem:[#allocation2 + $0xc] sm:$0xf] %v1628
  %v1639 = vunpack.c.l.b16 %v1570
  %v1640 = vunpack.c.h.b16 %v1570
  %v1641 = vunpack.c.l.b16 %v1595
  %v1642 = vunpack.c.h.b16 %v1595
  %v1643 = vpack.c.b16 %v1639, %v1639
  %v1644 = vpack.c.b16 %v1640, %v1640
  %v1645 = vpack.c.b16 %v1641, %v1641
  %v1646 = vpack.c.b16 %v1642, %v1642
  %1651 = vst [vmem:[#allocation2 + $0x10] sm:$0xf] %v1643
  %1652 = vst [vmem:[#allocation2 + $0x14] sm:$0xf] %v1644
  %1653 = vst [vmem:[#allocation2 + $0x18] sm:$0xf] %v1645
  %1654 = vst [vmem:[#allocation2 + $0x1c] sm:$0xf] %v1646
  %v1657 = vunpack.c.l.b16 %v1571
  %v1658 = vunpack.c.h.b16 %v1571
  %v1659 = vunpack.c.l.b16 %v1596
  %v1660 = vunpack.c.h.b16 %v1596
  %v1661 = vpack.c.b16 %v1657, %v1657
  %v1662 = vpack.c.b16 %v1658, %v1658
  %v1663 = vpack.c.b16 %v1659, %v1659
  %v1664 = vpack.c.b16 %v1660, %v1660
  %1669 = vst [vmem:[#allocation2 + $0x20] sm:$0xf] %v1661
  %1670 = vst [vmem:[#allocation2 + $0x24] sm:$0xf] %v1662
  %1671 = vst [vmem:[#allocation2 + $0x28] sm:$0xf] %v1663
  %1672 = vst [vmem:[#allocation2 + $0x2c] sm:$0xf] %v1664
  %v1675 = vunpack.c.l.b16 %v1572
  %v1676 = vunpack.c.h.b16 %v1572
  %v1677 = vunpack.c.l.b16 %v1597
  %v1678 = vunpack.c.h.b16 %v1597
  %v1679 = vpack.c.b16 %v1675, %v1675
  %v1680 = vpack.c.b16 %v1676, %v1676
  %v1681 = vpack.c.b16 %v1677, %v1677
  %v1682 = vpack.c.b16 %v1678, %v1678
  %1687 = vst [vmem:[#allocation2 + $0x30] sm:$0xf] %v1679
  %1688 = vst [vmem:[#allocation2 + $0x34] sm:$0xf] %v1680
  %1689 = vst [vmem:[#allocation2 + $0x38] sm:$0xf] %v1681
  %1690 = vst [vmem:[#allocation2 + $0x3c] sm:$0xf] %v1682
  %v1693 = vunpack.c.l.b16 %v1573
  %v1694 = vunpack.c.h.b16 %v1573
  %v1695 = vunpack.c.l.b16 %v1598
  %v1696 = vunpack.c.h.b16 %v1598
  %v1697 = vpack.c.b16 %v1693, %v1693
  %v1698 = vpack.c.b16 %v1694, %v1694
  %v1699 = vpack.c.b16 %v1695, %v1695
  %v1700 = vpack.c.b16 %v1696, %v1696
  %1705 = vst [vmem:[#allocation2 + $0x40] sm:$0xf] %v1697
  %1706 = vst [vmem:[#allocation2 + $0x44] sm:$0xf] %v1698
  %1707 = vst [vmem:[#allocation2 + $0x48] sm:$0xf] %v1699
  %1708 = vst [vmem:[#allocation2 + $0x4c] sm:$0xf] %v1700
  %v1711 = vunpack.c.l.b16 %v1574
  %v1712 = vunpack.c.h.b16 %v1574
  %v1713 = vunpack.c.l.b16 %v1599
  %v1714 = vunpack.c.h.b16 %v1599
  %v1715 = vpack.c.b16 %v1711, %v1711
  %v1716 = vpack.c.b16 %v1712, %v1712
  %v1717 = vpack.c.b16 %v1713, %v1713
  %v1718 = vpack.c.b16 %v1714, %v1714
  %1723 = vst [vmem:[#allocation2 + $0x50] sm:$0xf] %v1715
  %1724 = vst [vmem:[#allocation2 + $0x54] sm:$0xf] %v1716
  %1725 = vst [vmem:[#allocation2 + $0x58] sm:$0xf] %v1717
  %1726 = vst [vmem:[#allocation2 + $0x5c] sm:$0xf] %v1718
  %v1729 = vunpack.c.l.b16 %v1575
  %v1730 = vunpack.c.h.b16 %v1575
  %v1731 = vunpack.c.l.b16 %v1600
  %v1732 = vunpack.c.h.b16 %v1600
  %v1733 = vpack.c.b16 %v1729, %v1729
  %v1734 = vpack.c.b16 %v1730, %v1730
  %v1735 = vpack.c.b16 %v1731, %v1731
  %v1736 = vpack.c.b16 %v1732, %v1732
  %1741 = vst [vmem:[#allocation2 + $0x60] sm:$0xf] %v1733
  %1742 = vst [vmem:[#allocation2 + $0x64] sm:$0xf] %v1734
  %1743 = vst [vmem:[#allocation2 + $0x68] sm:$0xf] %v1735
  %1744 = vst [vmem:[#allocation2 + $0x6c] sm:$0xf] %v1736
  %v1747 = vunpack.c.l.b16 %v1576
  %v1748 = vunpack.c.h.b16 %v1576
  %v1749 = vunpack.c.l.b16 %v1601
  %v1750 = vunpack.c.h.b16 %v1601
  %v1751 = vpack.c.b16 %v1747, %v1747
  %v1752 = vpack.c.b16 %v1748, %v1748
  %v1753 = vpack.c.b16 %v1749, %v1749
  %v1754 = vpack.c.b16 %v1750, %v1750
  %1759 = vst [vmem:[#allocation2 + $0x70] sm:$0xf] %v1751
  %1760 = vst [vmem:[#allocation2 + $0x74] sm:$0xf] %v1752
  %1761 = vst [vmem:[#allocation2 + $0x78] sm:$0xf] %v1753
  %1762 = vst [vmem:[#allocation2 + $0x7c] sm:$0xf] %v1754
  %v1765 = vunpack.c.l.b16 %v1577
  %v1766 = vunpack.c.h.b16 %v1577
  %v1767 = vunpack.c.l.b16 %v1602
  %v1768 = vunpack.c.h.b16 %v1602
  %v1769 = vpack.c.b16 %v1765, %v1765
  %v1770 = vpack.c.b16 %v1766, %v1766
  %v1771 = vpack.c.b16 %v1767, %v1767
  %v1772 = vpack.c.b16 %v1768, %v1768
  %1777 = vst [vmem:[#allocation2 + $0x80] sm:$0xf] %v1769
  %1778 = vst [vmem:[#allocation2 + $0x84] sm:$0xf] %v1770
  %1779 = vst [vmem:[#allocation2 + $0x88] sm:$0xf] %v1771
  %1780 = vst [vmem:[#allocation2 + $0x8c] sm:$0xf] %v1772
  %v1783 = vunpack.c.l.b16 %v1578
  %v1784 = vunpack.c.h.b16 %v1578
  %v1785 = vunpack.c.l.b16 %v1603
  %v1786 = vunpack.c.h.b16 %v1603
  %v1787 = vpack.c.b16 %v1783, %v1783
  %v1788 = vpack.c.b16 %v1784, %v1784
  %v1789 = vpack.c.b16 %v1785, %v1785
  %v1790 = vpack.c.b16 %v1786, %v1786
  %1795 = vst [vmem:[#allocation2 + $0x90] sm:$0xf] %v1787
  %1796 = vst [vmem:[#allocation2 + $0x94] sm:$0xf] %v1788
  %1797 = vst [vmem:[#allocation2 + $0x98] sm:$0xf] %v1789
  %1798 = vst [vmem:[#allocation2 + $0x9c] sm:$0xf] %v1790
  %v1801 = vunpack.c.l.b16 %v1579
  %v1802 = vunpack.c.h.b16 %v1579
  %v1803 = vunpack.c.l.b16 %v1604
  %v1804 = vunpack.c.h.b16 %v1604
  %v1805 = vpack.c.b16 %v1801, %v1801
  %v1806 = vpack.c.b16 %v1802, %v1802
  %v1807 = vpack.c.b16 %v1803, %v1803
  %v1808 = vpack.c.b16 %v1804, %v1804
  %1813 = vst [vmem:[#allocation2 + $0xa0] sm:$0xf] %v1805
  %1814 = vst [vmem:[#allocation2 + $0xa4] sm:$0xf] %v1806
  %1815 = vst [vmem:[#allocation2 + $0xa8] sm:$0xf] %v1807
  %1816 = vst [vmem:[#allocation2 + $0xac] sm:$0xf] %v1808
  %v1819 = vunpack.c.l.b16 %v1580
  %v1820 = vunpack.c.h.b16 %v1580
  %v1821 = vunpack.c.l.b16 %v1605
  %v1822 = vunpack.c.h.b16 %v1605
  %v1823 = vpack.c.b16 %v1819, %v1819
  %v1824 = vpack.c.b16 %v1820, %v1820
  %v1825 = vpack.c.b16 %v1821, %v1821
  %v1826 = vpack.c.b16 %v1822, %v1822
  %1831 = vst [vmem:[#allocation2 + $0xb0] sm:$0xf] %v1823
  %1832 = vst [vmem:[#allocation2 + $0xb4] sm:$0xf] %v1824
  %1833 = vst [vmem:[#allocation2 + $0xb8] sm:$0xf] %v1825
  %1834 = vst [vmem:[#allocation2 + $0xbc] sm:$0xf] %v1826
  %v1837 = vunpack.c.l.b16 %v1581
  %v1838 = vunpack.c.h.b16 %v1581
  %v1839 = vunpack.c.l.b16 %v1606
  %v1840 = vunpack.c.h.b16 %v1606
  %v1841 = vpack.c.b16 %v1837, %v1837
  %v1842 = vpack.c.b16 %v1838, %v1838
  %v1843 = vpack.c.b16 %v1839, %v1839
  %v1844 = vpack.c.b16 %v1840, %v1840
  %1849 = vst [vmem:[#allocation2 + $0xc0] sm:$0xf] %v1841
  %1850 = vst [vmem:[#allocation2 + $0xc4] sm:$0xf] %v1842
  %1851 = vst [vmem:[#allocation2 + $0xc8] sm:$0xf] %v1843
  %1852 = vst [vmem:[#allocation2 + $0xcc] sm:$0xf] %v1844
  %v1855 = vunpack.c.l.b16 %v1582
  %v1856 = vunpack.c.h.b16 %v1582
  %v1857 = vunpack.c.l.b16 %v1607
  %v1858 = vunpack.c.h.b16 %v1607
  %v1859 = vpack.c.b16 %v1855, %v1855
  %v1860 = vpack.c.b16 %v1856, %v1856
  %v1861 = vpack.c.b16 %v1857, %v1857
  %v1862 = vpack.c.b16 %v1858, %v1858
  %1867 = vst [vmem:[#allocation2 + $0xd0] sm:$0xf] %v1859
  %1868 = vst [vmem:[#allocation2 + $0xd4] sm:$0xf] %v1860
  %1869 = vst [vmem:[#allocation2 + $0xd8] sm:$0xf] %v1861
  %1870 = vst [vmem:[#allocation2 + $0xdc] sm:$0xf] %v1862
  %v1873 = vunpack.c.l.b16 %v1583
  %v1874 = vunpack.c.h.b16 %v1583
  %v1875 = vunpack.c.l.b16 %v1608
  %v1876 = vunpack.c.h.b16 %v1608
  %v1877 = vpack.c.b16 %v1873, %v1873
  %v1878 = vpack.c.b16 %v1874, %v1874
  %v1879 = vpack.c.b16 %v1875, %v1875
  %v1880 = vpack.c.b16 %v1876, %v1876
  %1885 = vst [vmem:[#allocation2 + $0xe0] sm:$0xf] %v1877
  %1886 = vst [vmem:[#allocation2 + $0xe4] sm:$0xf] %v1878
  %1887 = vst [vmem:[#allocation2 + $0xe8] sm:$0xf] %v1879
  %1888 = vst [vmem:[#allocation2 + $0xec] sm:$0xf] %v1880
  %v1891 = vunpack.c.l.b16 %v1584
  %v1892 = vunpack.c.h.b16 %v1584
  %v1893 = vunpack.c.l.b16 %v1609
  %v1894 = vunpack.c.h.b16 %v1609
  %v1895 = vpack.c.b16 %v1891, %v1891
  %v1896 = vpack.c.b16 %v1892, %v1892
  %v1897 = vpack.c.b16 %v1893, %v1893
  %v1898 = vpack.c.b16 %v1894, %v1894
  %1903 = vst [vmem:[#allocation2 + $0xf0] sm:$0xf] %v1895
  %1904 = vst [vmem:[#allocation2 + $0xf4] sm:$0xf] %v1896
  %1905 = vst [vmem:[#allocation2 + $0xf8] sm:$0xf] %v1897
  %1906 = vst [vmem:[#allocation2 + $0xfc] sm:$0xf] %v1898
  %v1909 = vunpack.c.l.b16 %v1585
  %v1910 = vunpack.c.h.b16 %v1585
  %v1911 = vunpack.c.l.b16 %v1610
  %v1912 = vunpack.c.h.b16 %v1610
  %v1913 = vpack.c.b16 %v1909, %v1909
  %v1914 = vpack.c.b16 %v1910, %v1910
  %v1915 = vpack.c.b16 %v1911, %v1911
  %v1916 = vpack.c.b16 %v1912, %v1912
  %1921 = vst [vmem:[#allocation2 + $0x100] sm:$0xf] %v1913
  %1922 = vst [vmem:[#allocation2 + $0x104] sm:$0xf] %v1914
  %1923 = vst [vmem:[#allocation2 + $0x108] sm:$0xf] %v1915
  %1924 = vst [vmem:[#allocation2 + $0x10c] sm:$0xf] %v1916
  %v1927 = vunpack.c.l.b16 %v1586
  %v1928 = vunpack.c.h.b16 %v1586
  %v1929 = vunpack.c.l.b16 %v1611
  %v1930 = vunpack.c.h.b16 %v1611
  %v1931 = vpack.c.b16 %v1927, %v1927
  %v1932 = vpack.c.b16 %v1928, %v1928
  %v1933 = vpack.c.b16 %v1929, %v1929
  %v1934 = vpack.c.b16 %v1930, %v1930
  %1939 = vst [vmem:[#allocation2 + $0x110] sm:$0xf] %v1931
  %1940 = vst [vmem:[#allocation2 + $0x114] sm:$0xf] %v1932
  %1941 = vst [vmem:[#allocation2 + $0x118] sm:$0xf] %v1933
  %1942 = vst [vmem:[#allocation2 + $0x11c] sm:$0xf] %v1934
  %v1945 = vunpack.c.l.b16 %v1587
  %v1946 = vunpack.c.h.b16 %v1587
  %v1947 = vunpack.c.l.b16 %v1612
  %v1948 = vunpack.c.h.b16 %v1612
  %v1949 = vpack.c.b16 %v1945, %v1945
  %v1950 = vpack.c.b16 %v1946, %v1946
  %v1951 = vpack.c.b16 %v1947, %v1947
  %v1952 = vpack.c.b16 %v1948, %v1948
  %1957 = vst [vmem:[#allocation2 + $0x120] sm:$0xf] %v1949
  %1958 = vst [vmem:[#allocation2 + $0x124] sm:$0xf] %v1950
  %1959 = vst [vmem:[#allocation2 + $0x128] sm:$0xf] %v1951
  %1960 = vst [vmem:[#allocation2 + $0x12c] sm:$0xf] %v1952
  %v1963 = vunpack.c.l.b16 %v1588
  %v1964 = vunpack.c.h.b16 %v1588
  %v1965 = vunpack.c.l.b16 %v1613
  %v1966 = vunpack.c.h.b16 %v1613
  %v1967 = vpack.c.b16 %v1963, %v1963
  %v1968 = vpack.c.b16 %v1964, %v1964
  %v1969 = vpack.c.b16 %v1965, %v1965
  %v1970 = vpack.c.b16 %v1966, %v1966
  %1975 = vst [vmem:[#allocation2 + $0x130] sm:$0xf] %v1967
  %1976 = vst [vmem:[#allocation2 + $0x134] sm:$0xf] %v1968
  %1977 = vst [vmem:[#allocation2 + $0x138] sm:$0xf] %v1969
  %1978 = vst [vmem:[#allocation2 + $0x13c] sm:$0xf] %v1970
  %v1981 = vunpack.c.l.b16 %v1589
  %v1982 = vunpack.c.h.b16 %v1589
  %v1983 = vunpack.c.l.b16 %v1614
  %v1984 = vunpack.c.h.b16 %v1614
  %v1985 = vpack.c.b16 %v1981, %v1981
  %v1986 = vpack.c.b16 %v1982, %v1982
  %v1987 = vpack.c.b16 %v1983, %v1983
  %v1988 = vpack.c.b16 %v1984, %v1984
  %1993 = vst [vmem:[#allocation2 + $0x140] sm:$0xf] %v1985
  %1994 = vst [vmem:[#allocation2 + $0x144] sm:$0xf] %v1986
  %1995 = vst [vmem:[#allocation2 + $0x148] sm:$0xf] %v1987
  %1996 = vst [vmem:[#allocation2 + $0x14c] sm:$0xf] %v1988
  %v1999 = vunpack.c.l.b16 %v1590
  %v2000 = vunpack.c.h.b16 %v1590
  %v2001 = vunpack.c.l.b16 %v1615
  %v2002 = vunpack.c.h.b16 %v1615
  %v2003 = vpack.c.b16 %v1999, %v1999
  %v2004 = vpack.c.b16 %v2000, %v2000
  %v2005 = vpack.c.b16 %v2001, %v2001
  %v2006 = vpack.c.b16 %v2002, %v2002
  %2011 = vst [vmem:[#allocation2 + $0x150] sm:$0xf] %v2003
  %2012 = vst [vmem:[#allocation2 + $0x154] sm:$0xf] %v2004
  %2013 = vst [vmem:[#allocation2 + $0x158] sm:$0xf] %v2005
  %2014 = vst [vmem:[#allocation2 + $0x15c] sm:$0xf] %v2006
  %v2017 = vunpack.c.l.b16 %v1591
  %v2018 = vunpack.c.h.b16 %v1591
  %v2019 = vunpack.c.l.b16 %v1616
  %v2020 = vunpack.c.h.b16 %v1616
  %v2021 = vpack.c.b16 %v2017, %v2017
  %v2022 = vpack.c.b16 %v2018, %v2018
  %v2023 = vpack.c.b16 %v2019, %v2019
  %v2024 = vpack.c.b16 %v2020, %v2020
  %2029 = vst [vmem:[#allocation2 + $0x160] sm:$0xf] %v2021
  %2030 = vst [vmem:[#allocation2 + $0x164] sm:$0xf] %v2022
  %2031 = vst [vmem:[#allocation2 + $0x168] sm:$0xf] %v2023
  %2032 = vst [vmem:[#allocation2 + $0x16c] sm:$0xf] %v2024
  %v2035 = vunpack.c.l.b16 %v1592
  %v2036 = vunpack.c.h.b16 %v1592
  %v2037 = vunpack.c.l.b16 %v1617
  %v2038 = vunpack.c.h.b16 %v1617
  %v2039 = vpack.c.b16 %v2035, %v2035
  %v2040 = vpack.c.b16 %v2036, %v2036
  %v2041 = vpack.c.b16 %v2037, %v2037
  %v2042 = vpack.c.b16 %v2038, %v2038
  %2047 = vst [vmem:[#allocation2 + $0x170] sm:$0xf] %v2039
  %2048 = vst [vmem:[#allocation2 + $0x174] sm:$0xf] %v2040
  %2049 = vst [vmem:[#allocation2 + $0x178] sm:$0xf] %v2041
  %2050 = vst [vmem:[#allocation2 + $0x17c] sm:$0xf] %v2042
  %v2053 = vunpack.c.l.b16 %v1593
  %v2054 = vunpack.c.h.b16 %v1593
  %v2055 = vunpack.c.l.b16 %v1618
  %v2056 = vunpack.c.h.b16 %v1618
  %v2057 = vpack.c.b16 %v2053, %v2053
  %v2058 = vpack.c.b16 %v2054, %v2054
  %v2059 = vpack.c.b16 %v2055, %v2055
  %v2060 = vpack.c.b16 %v2056, %v2056
  %2065 = vst [vmem:[#allocation2 + $0x180] sm:$0xf] %v2057
  %2066 = vst [vmem:[#allocation2 + $0x184] sm:$0xf] %v2058
  %2067 = vst [vmem:[#allocation2 + $0x188] sm:$0xf] %v2059
  %2068 = vst [vmem:[#allocation2 + $0x18c] sm:$0xf] %v2060
  %v2069 = vld [vmem:[%s3] sm:$0xff]
  %v2070 = vld [vmem:[%s3 + $0x8] sm:$0xff]
  %v2071 = vld [vmem:[%s3 + $0x10] sm:$0xff]
  %v2072 = vld [vmem:[%s3 + $0x18] sm:$0xf]
  %v2073 = vld [vmem:[%s3 + $0x1c] sm:$0xff]
  %v2074 = vld [vmem:[%s3 + $0x24] sm:$0xff]
  %v2075 = vld [vmem:[%s3 + $0x2c] sm:$0xff]
  %v2076 = vld [vmem:[%s3 + $0x34] sm:$0xf]
  %v2077 = vld [vmem:[%s3 + $0x38] sm:$0xff]
  %v2078 = vld [vmem:[%s3 + $0x40] sm:$0xff]
  %v2079 = vld [vmem:[%s3 + $0x48] sm:$0xff]
  %v2080 = vld [vmem:[%s3 + $0x50] sm:$0xf]
  %v2081 = vld [vmem:[%s3 + $0x54] sm:$0xff]
  %v2082 = vld [vmem:[%s3 + $0x5c] sm:$0xff]
  %v2083 = vld [vmem:[%s3 + $0x64] sm:$0xff]
  %v2084 = vld [vmem:[%s3 + $0x6c] sm:$0xf]
  %v2085 = vld [vmem:[%s3 + $0x70] sm:$0xff]
  %v2086 = vld [vmem:[%s3 + $0x78] sm:$0xff]
  %v2087 = vld [vmem:[%s3 + $0x80] sm:$0xff]
  %v2088 = vld [vmem:[%s3 + $0x88] sm:$0xf]
  %v2089 = vld [vmem:[%s3 + $0x8c] sm:$0xff]
  %v2090 = vld [vmem:[%s3 + $0x94] sm:$0xff]
  %v2091 = vld [vmem:[%s3 + $0x9c] sm:$0xff]
  %v2092 = vld [vmem:[%s3 + $0xa4] sm:$0xf]
  %v2093 = vld [vmem:[%s3 + $0xa8] sm:$0xff]
  %v2094 = vld [vmem:[%s3 + $0xb0] sm:$0xff]
  %v2095 = vld [vmem:[%s3 + $0xb8] sm:$0xff]
  %v2096 = vld [vmem:[%s3 + $0xc0] sm:$0xf]
  %v2097 = vld [vmem:[%s3 + $0xc4] sm:$0xff]
  %v2098 = vld [vmem:[%s3 + $0xcc] sm:$0xff]
  %v2099 = vld [vmem:[%s3 + $0xd4] sm:$0xff]
  %v2100 = vld [vmem:[%s3 + $0xdc] sm:$0xf]
  %v2101 = vld [vmem:[#allocation2] sm:$0xf]
  %v2102 = vld [vmem:[#allocation2 + $0x4] sm:$0xf]
  %v2103 = vld [vmem:[#allocation2 + $0x8] sm:$0xf]
  %v2104 = vld [vmem:[#allocation2 + $0xc] sm:$0xf]
  %v2105 = vld [vmem:[#allocation2 + $0x10] sm:$0xf]
  %v2106 = vld [vmem:[#allocation2 + $0x14] sm:$0xf]
  %v2107 = vld [vmem:[#allocation2 + $0x18] sm:$0xf]
  %v2108 = vld [vmem:[#allocation2 + $0x1c] sm:$0xf]
  %v2109 = vld [vmem:[#allocation2 + $0x20] sm:$0xf]
  %v2110 = vld [vmem:[#allocation2 + $0x24] sm:$0xf]
  %v2111 = vld [vmem:[#allocation2 + $0x28] sm:$0xf]
  %v2112 = vld [vmem:[#allocation2 + $0x2c] sm:$0xf]
  %v2113 = vld [vmem:[#allocation2 + $0x30] sm:$0xf]
  %v2114 = vld [vmem:[#allocation2 + $0x34] sm:$0xf]
  %v2115 = vld [vmem:[#allocation2 + $0x38] sm:$0xf]
  %v2116 = vld [vmem:[#allocation2 + $0x3c] sm:$0xf]
  %v2117 = vld [vmem:[#allocation2 + $0x40] sm:$0xf]
  %v2118 = vld [vmem:[#allocation2 + $0x44] sm:$0xf]
  %v2119 = vld [vmem:[#allocation2 + $0x48] sm:$0xf]
  %v2120 = vld [vmem:[#allocation2 + $0x4c] sm:$0xf]
  %v2121 = vld [vmem:[#allocation2 + $0x50] sm:$0xf]
  %v2122 = vld [vmem:[#allocation2 + $0x54] sm:$0xf]
  %v2123 = vld [vmem:[#allocation2 + $0x58] sm:$0xf]
  %v2124 = vld [vmem:[#allocation2 + $0x5c] sm:$0xf]
  %v2125 = vld [vmem:[#allocation2 + $0x60] sm:$0xf]
  %v2126 = vld [vmem:[#allocation2 + $0x64] sm:$0xf]
  %v2127 = vld [vmem:[#allocation2 + $0x68] sm:$0xf]
  %v2128 = vld [vmem:[#allocation2 + $0x6c] sm:$0xf]
  %v2129 = vld [vmem:[#allocation2 + $0x70] sm:$0xf]
  %v2130 = vld [vmem:[#allocation2 + $0x74] sm:$0xf]
  %v2131 = vld [vmem:[#allocation2 + $0x78] sm:$0xf]
  %v2132 = vld [vmem:[#allocation2 + $0x7c] sm:$0xf]
  %v2133 = vld [vmem:[#allocation2 + $0x80] sm:$0xf]
  %v2134 = vld [vmem:[#allocation2 + $0x84] sm:$0xf]
  %v2135 = vld [vmem:[#allocation2 + $0x88] sm:$0xf]
  %v2136 = vld [vmem:[#allocation2 + $0x8c] sm:$0xf]
  %v2137 = vld [vmem:[#allocation2 + $0x90] sm:$0xf]
  %v2138 = vld [vmem:[#allocation2 + $0x94] sm:$0xf]
  %v2139 = vld [vmem:[#allocation2 + $0x98] sm:$0xf]
  %v2140 = vld [vmem:[#allocation2 + $0x9c] sm:$0xf]
  %v2141 = vld [vmem:[#allocation2 + $0xa0] sm:$0xf]
  %v2142 = vld [vmem:[#allocation2 + $0xa4] sm:$0xf]
  %v2143 = vld [vmem:[#allocation2 + $0xa8] sm:$0xf]
  %v2144 = vld [vmem:[#allocation2 + $0xac] sm:$0xf]
  %v2145 = vld [vmem:[#allocation2 + $0xb0] sm:$0xf]
  %v2146 = vld [vmem:[#allocation2 + $0xb4] sm:$0xf]
  %v2147 = vld [vmem:[#allocation2 + $0xb8] sm:$0xf]
  %v2148 = vld [vmem:[#allocation2 + $0xbc] sm:$0xf]
  %v2149 = vld [vmem:[#allocation2 + $0xc0] sm:$0xf]
  %v2150 = vld [vmem:[#allocation2 + $0xc4] sm:$0xf]
  %v2151 = vld [vmem:[#allocation2 + $0xc8] sm:$0xf]
  %v2152 = vld [vmem:[#allocation2 + $0xcc] sm:$0xf]
  %v2153 = vld [vmem:[#allocation2 + $0xd0] sm:$0xf]
  %v2154 = vld [vmem:[#allocation2 + $0xd4] sm:$0xf]
  %v2155 = vld [vmem:[#allocation2 + $0xd8] sm:$0xf]
  %v2156 = vld [vmem:[#allocation2 + $0xdc] sm:$0xf]
  %v2157 = vld [vmem:[#allocation2 + $0xe0] sm:$0xf]
  %v2158 = vld [vmem:[#allocation2 + $0xe4] sm:$0xf]
  %v2159 = vld [vmem:[#allocation2 + $0xe8] sm:$0xf]
  %v2160 = vld [vmem:[#allocation2 + $0xec] sm:$0xf]
  %v2161 = vld [vmem:[#allocation2 + $0xf0] sm:$0xf]
  %v2162 = vld [vmem:[#allocation2 + $0xf4] sm:$0xf]
  %v2163 = vld [vmem:[#allocation2 + $0xf8] sm:$0xf]
  %v2164 = vld [vmem:[#allocation2 + $0xfc] sm:$0xf]
  %v2165 = vld [vmem:[#allocation2 + $0x100] sm:$0xf]
  %v2166 = vld [vmem:[#allocation2 + $0x104] sm:$0xf]
  %v2167 = vld [vmem:[#allocation2 + $0x108] sm:$0xf]
  %v2168 = vld [vmem:[#allocation2 + $0x10c] sm:$0xf]
  %v2169 = vld [vmem:[#allocation2 + $0x110] sm:$0xf]
  %v2170 = vld [vmem:[#allocation2 + $0x114] sm:$0xf]
  %v2171 = vld [vmem:[#allocation2 + $0x118] sm:$0xf]
  %v2172 = vld [vmem:[#allocation2 + $0x11c] sm:$0xf]
  %v2173 = vld [vmem:[#allocation2 + $0x120] sm:$0xf]
  %v2174 = vld [vmem:[#allocation2 + $0x124] sm:$0xf]
  %v2175 = vld [vmem:[#allocation2 + $0x128] sm:$0xf]
  %v2176 = vld [vmem:[#allocation2 + $0x12c] sm:$0xf]
  %v2177 = vld [vmem:[#allocation2 + $0x130] sm:$0xf]
  %v2178 = vld [vmem:[#allocation2 + $0x134] sm:$0xf]
  %v2179 = vld [vmem:[#allocation2 + $0x138] sm:$0xf]
  %v2180 = vld [vmem:[#allocation2 + $0x13c] sm:$0xf]
  %v2181 = vld [vmem:[#allocation2 + $0x140] sm:$0xf]
  %v2182 = vld [vmem:[#allocation2 + $0x144] sm:$0xf]
  %v2183 = vld [vmem:[#allocation2 + $0x148] sm:$0xf]
  %v2184 = vld [vmem:[#allocation2 + $0x14c] sm:$0xf]
  %v2185 = vld [vmem:[#allocation2 + $0x150] sm:$0xf]
  %v2186 = vld [vmem:[#allocation2 + $0x154] sm:$0xf]
  %v2187 = vld [vmem:[#allocation2 + $0x158] sm:$0xf]
  %v2188 = vld [vmem:[#allocation2 + $0x15c] sm:$0xf]
  %v2189 = vld [vmem:[#allocation2 + $0x160] sm:$0xf]
  %v2190 = vld [vmem:[#allocation2 + $0x164] sm:$0xf]
  %v2191 = vld [vmem:[#allocation2 + $0x168] sm:$0xf]
  %v2192 = vld [vmem:[#allocation2 + $0x16c] sm:$0xf]
  %v2193 = vld [vmem:[#allocation2 + $0x170] sm:$0xf]
  %v2194 = vld [vmem:[#allocation2 + $0x174] sm:$0xf]
  %v2195 = vld [vmem:[#allocation2 + $0x178] sm:$0xf]
  %v2196 = vld [vmem:[#allocation2 + $0x17c] sm:$0xf]
  %v2197 = vld [vmem:[#allocation2 + $0x180] sm:$0xf]
  %v2198 = vld [vmem:[#allocation2 + $0x184] sm:$0xf]
  %v2199 = vld [vmem:[#allocation2 + $0x188] sm:$0xf]
  %v2200 = vld [vmem:[#allocation2 + $0x18c] sm:$0xf]
  %v2201 = vld [vmem:[%s4] sm:$0xff]
  %v2202 = vld [vmem:[%s4 + $0x8] sm:$0xff]
  %v2203 = vld [vmem:[%s4 + $0x10] sm:$0xff]
  %v2204 = vld [vmem:[%s4 + $0x18] sm:$0xff]
  %v2205 = vld [vmem:[%s4 + $0x20] sm:$0xff]
  %v2206 = vld [vmem:[%s4 + $0x28] sm:$0xff]
  %v2207 = vld [vmem:[%s4 + $0x30] sm:$0xff]
  %v2208 = vld [vmem:[%s4 + $0x38] sm:$0xff]
  %2210 = vset.pattern.permute.xlu0 0
  %2211 = vperm.xlu0 %2210, %v2201
  %v2212 = vpop.permute.xlu0 %2211
  %2215 = vset.pattern.permute.xlu0 0
  %2216 = vperm.xlu0 %2215, %v2202
  %v2217 = vpop.permute.xlu0 %2216
  %2220 = vset.pattern.permute.xlu0 0
  %2221 = vperm.xlu0 %2220, %v2203
  %v2222 = vpop.permute.xlu0 %2221
  %2225 = vset.pattern.permute.xlu0 0
  %2226 = vperm.xlu0 %2225, %v2204
  %v2227 = vpop.permute.xlu0 %2226
  %2230 = vset.pattern.permute.xlu0 0
  %2231 = vperm.xlu0 %2230, %v2205
  %v2232 = vpop.permute.xlu0 %2231
  %2235 = vset.pattern.permute.xlu0 0
  %2236 = vperm.xlu0 %2235, %v2206
  %v2237 = vpop.permute.xlu0 %2236
  %2240 = vset.pattern.permute.xlu0 0
  %2241 = vperm.xlu0 %2240, %v2207
  %v2242 = vpop.permute.xlu0 %2241
  %2245 = vset.pattern.permute.xlu0 0
  %2246 = vperm.xlu0 %2245, %v2208
  %v2247 = vpop.permute.xlu0 %2246
  %v2281 = vunpack.c.l.b16 %v2069
  %v2282 = vunpack.c.h.b16 %v2069
  %v2283 = vunpack.c.l.b16 %v2070
  %v2284 = vunpack.c.h.b16 %v2070
  %v2285 = vunpack.c.l.b16 %v2071
  %v2286 = vunpack.c.h.b16 %v2071
  %v2287 = vunpack.c.l.b16 %v2072
  %v2288 = vunpack.c.l.b16 %v2073
  %v2289 = vunpack.c.h.b16 %v2073
  %v2290 = vunpack.c.l.b16 %v2074
  %v2291 = vunpack.c.h.b16 %v2074
  %v2292 = vunpack.c.l.b16 %v2075
  %v2293 = vunpack.c.h.b16 %v2075
  %v2294 = vunpack.c.l.b16 %v2076
  %v2295 = vunpack.c.l.b16 %v2077
  %v2296 = vunpack.c.h.b16 %v2077
  %v2297 = vunpack.c.l.b16 %v2078
  %v2298 = vunpack.c.h.b16 %v2078
  %v2299 = vunpack.c.l.b16 %v2079
  %v2300 = vunpack.c.h.b16 %v2079
  %v2301 = vunpack.c.l.b16 %v2080
  %v2302 = vunpack.c.l.b16 %v2081
  %v2303 = vunpack.c.h.b16 %v2081
  %v2304 = vunpack.c.l.b16 %v2082
  %v2305 = vunpack.c.h.b16 %v2082
  %v2306 = vunpack.c.l.b16 %v2083
  %v2307 = vunpack.c.h.b16 %v2083
  %v2308 = vunpack.c.l.b16 %v2084
  %v2309 = vunpack.c.l.b16 %v2085
  %v2310 = vunpack.c.h.b16 %v2085
  %v2311 = vunpack.c.l.b16 %v2086
  %v2312 = vunpack.c.h.b16 %v2086
  %v2313 = vunpack.c.l.b16 %v2087
  %v2314 = vunpack.c.h.b16 %v2087
  %v2315 = vunpack.c.l.b16 %v2088
  %v2316 = vunpack.c.l.b16 %v2089
  %v2317 = vunpack.c.h.b16 %v2089
  %v2318 = vunpack.c.l.b16 %v2090
  %v2319 = vunpack.c.h.b16 %v2090
  %v2320 = vunpack.c.l.b16 %v2091
  %v2321 = vunpack.c.h.b16 %v2091
  %v2322 = vunpack.c.l.b16 %v2092
  %v2323 = vunpack.c.l.b16 %v2093
  %v2324 = vunpack.c.h.b16 %v2093
  %v2325 = vunpack.c.l.b16 %v2094
  %v2326 = vunpack.c.h.b16 %v2094
  %v2327 = vunpack.c.l.b16 %v2095
  %v2328 = vunpack.c.h.b16 %v2095
  %v2329 = vunpack.c.l.b16 %v2096
  %v2330 = vunpack.c.l.b16 %v2097
  %v2331 = vunpack.c.h.b16 %v2097
  %v2332 = vunpack.c.l.b16 %v2098
  %v2333 = vunpack.c.h.b16 %v2098
  %v2334 = vunpack.c.l.b16 %v2099
  %v2335 = vunpack.c.h.b16 %v2099
  %v2336 = vunpack.c.l.b16 %v2100
  %v2337 = vpack.c.b16 %v2288, %v2281
  %v2338 = vpack.c.b16 %v2289, %v2282
  %v2339 = vpack.c.b16 %v2290, %v2283
  %v2340 = vpack.c.b16 %v2291, %v2284
  %v2341 = vpack.c.b16 %v2292, %v2285
  %v2342 = vpack.c.b16 %v2293, %v2286
  %v2343 = vpack.c.b16 %v2294, %v2287
  %v2344 = vpack.c.b16 %v2302, %v2295
  %v2345 = vpack.c.b16 %v2303, %v2296
  %v2346 = vpack.c.b16 %v2304, %v2297
  %v2347 = vpack.c.b16 %v2305, %v2298
  %v2348 = vpack.c.b16 %v2306, %v2299
  %v2349 = vpack.c.b16 %v2307, %v2300
  %v2350 = vpack.c.b16 %v2308, %v2301
  %v2351 = vpack.c.b16 %v2316, %v2309
  %v2352 = vpack.c.b16 %v2317, %v2310
  %v2353 = vpack.c.b16 %v2318, %v2311
  %v2354 = vpack.c.b16 %v2319, %v2312
  %v2355 = vpack.c.b16 %v2320, %v2313
  %v2356 = vpack.c.b16 %v2321, %v2314
  %v2357 = vpack.c.b16 %v2322, %v2315
  %v2358 = vpack.c.b16 %v2330, %v2323
  %v2359 = vpack.c.b16 %v2331, %v2324
  %v2360 = vpack.c.b16 %v2332, %v2325
  %v2361 = vpack.c.b16 %v2333, %v2326
  %v2362 = vpack.c.b16 %v2334, %v2327
  %v2363 = vpack.c.b16 %v2335, %v2328
  %v2364 = vpack.c.b16 %v2336, %v2329
  %v2489 = vunpack.c.l.b16 %v2101
  %v2490 = vunpack.c.l.b16 %v2102
  %v2491 = vunpack.c.l.b16 %v2103
  %v2492 = vunpack.c.l.b16 %v2104
  %v2493 = vunpack.c.l.b16 %v2105
  %v2494 = vunpack.c.l.b16 %v2106
  %v2495 = vunpack.c.l.b16 %v2107
  %v2496 = vunpack.c.l.b16 %v2108
  %v2497 = vunpack.c.l.b16 %v2109
  %v2498 = vunpack.c.l.b16 %v2110
  %v2499 = vunpack.c.l.b16 %v2111
  %v2500 = vunpack.c.l.b16 %v2112
  %v2501 = vunpack.c.l.b16 %v2113
  %v2502 = vunpack.c.l.b16 %v2114
  %v2503 = vunpack.c.l.b16 %v2115
  %v2504 = vunpack.c.l.b16 %v2116
  %v2505 = vunpack.c.l.b16 %v2117
  %v2506 = vunpack.c.l.b16 %v2118
  %v2507 = vunpack.c.l.b16 %v2119
  %v2508 = vunpack.c.l.b16 %v2120
  %v2509 = vunpack.c.l.b16 %v2121
  %v2510 = vunpack.c.l.b16 %v2122
  %v2511 = vunpack.c.l.b16 %v2123
  %v2512 = vunpack.c.l.b16 %v2124
  %v2513 = vunpack.c.l.b16 %v2125
  %v2514 = vunpack.c.l.b16 %v2126
  %v2515 = vunpack.c.l.b16 %v2127
  %v2516 = vunpack.c.l.b16 %v2128
  %v2517 = vunpack.c.l.b16 %v2129
  %v2518 = vunpack.c.l.b16 %v2130
  %v2519 = vunpack.c.l.b16 %v2131
  %v2520 = vunpack.c.l.b16 %v2132
  %v2521 = vunpack.c.l.b16 %v2133
  %v2522 = vunpack.c.l.b16 %v2134
  %v2523 = vunpack.c.l.b16 %v2135
  %v2524 = vunpack.c.l.b16 %v2136
  %v2525 = vunpack.c.l.b16 %v2137
  %v2526 = vunpack.c.l.b16 %v2138
  %v2527 = vunpack.c.l.b16 %v2139
  %v2528 = vunpack.c.l.b16 %v2140
  %v2529 = vunpack.c.l.b16 %v2141
  %v2530 = vunpack.c.l.b16 %v2142
  %v2531 = vunpack.c.l.b16 %v2143
  %v2532 = vunpack.c.l.b16 %v2144
  %v2533 = vunpack.c.l.b16 %v2145
  %v2534 = vunpack.c.l.b16 %v2146
  %v2535 = vunpack.c.l.b16 %v2147
  %v2536 = vunpack.c.l.b16 %v2148
  %v2537 = vunpack.c.l.b16 %v2149
  %v2538 = vunpack.c.l.b16 %v2150
  %v2539 = vunpack.c.l.b16 %v2151
  %v2540 = vunpack.c.l.b16 %v2152
  %v2541 = vunpack.c.l.b16 %v2153
  %v2542 = vunpack.c.l.b16 %v2154
  %v2543 = vunpack.c.l.b16 %v2155
  %v2544 = vunpack.c.l.b16 %v2156
  %v2545 = vunpack.c.l.b16 %v2157
  %v2546 = vunpack.c.l.b16 %v2158
  %v2547 = vunpack.c.l.b16 %v2159
  %v2548 = vunpack.c.l.b16 %v2160
  %v2549 = vunpack.c.l.b16 %v2161
  %v2550 = vunpack.c.l.b16 %v2162
  %v2551 = vunpack.c.l.b16 %v2163
  %v2552 = vunpack.c.l.b16 %v2164
  %v2553 = vunpack.c.l.b16 %v2165
  %v2554 = vunpack.c.l.b16 %v2166
  %v2555 = vunpack.c.l.b16 %v2167
  %v2556 = vunpack.c.l.b16 %v2168
  %v2557 = vunpack.c.l.b16 %v2169
  %v2558 = vunpack.c.l.b16 %v2170
  %v2559 = vunpack.c.l.b16 %v2171
  %v2560 = vunpack.c.l.b16 %v2172
  %v2561 = vunpack.c.l.b16 %v2173
  %v2562 = vunpack.c.l.b16 %v2174
  %v2563 = vunpack.c.l.b16 %v2175
  %v2564 = vunpack.c.l.b16 %v2176
  %v2565 = vunpack.c.l.b16 %v2177
  %v2566 = vunpack.c.l.b16 %v2178
  %v2567 = vunpack.c.l.b16 %v2179
  %v2568 = vunpack.c.l.b16 %v2180
  %v2569 = vunpack.c.l.b16 %v2181
  %v2570 = vunpack.c.l.b16 %v2182
  %v2571 = vunpack.c.l.b16 %v2183
  %v2572 = vunpack.c.l.b16 %v2184
  %v2573 = vunpack.c.l.b16 %v2185
  %v2574 = vunpack.c.l.b16 %v2186
  %v2575 = vunpack.c.l.b16 %v2187
  %v2576 = vunpack.c.l.b16 %v2188
  %v2577 = vunpack.c.l.b16 %v2189
  %v2578 = vunpack.c.l.b16 %v2190
  %v2579 = vunpack.c.l.b16 %v2191
  %v2580 = vunpack.c.l.b16 %v2192
  %v2581 = vunpack.c.l.b16 %v2193
  %v2582 = vunpack.c.l.b16 %v2194
  %v2583 = vunpack.c.l.b16 %v2195
  %v2584 = vunpack.c.l.b16 %v2196
  %v2585 = vunpack.c.l.b16 %v2197
  %v2586 = vunpack.c.l.b16 %v2198
  %v2587 = vunpack.c.l.b16 %v2199
  %v2588 = vunpack.c.l.b16 %v2200
  %v2589 = vpack.c.b16 %v2490, %v2489
  %v2590 = vpack.c.b16 %v2492, %v2491
  %v2591 = vpack.c.b16 %v2494, %v2493
  %v2592 = vpack.c.b16 %v2496, %v2495
  %v2593 = vpack.c.b16 %v2498, %v2497
  %v2594 = vpack.c.b16 %v2500, %v2499
  %v2595 = vpack.c.b16 %v2502, %v2501
  %v2596 = vpack.c.b16 %v2504, %v2503
  %v2597 = vpack.c.b16 %v2506, %v2505
  %v2598 = vpack.c.b16 %v2508, %v2507
  %v2599 = vpack.c.b16 %v2510, %v2509
  %v2600 = vpack.c.b16 %v2512, %v2511
  %v2601 = vpack.c.b16 %v2514, %v2513
  %v2602 = vpack.c.b16 %v2516, %v2515
  %v2603 = vpack.c.b16 %v2518, %v2517
  %v2604 = vpack.c.b16 %v2520, %v2519
  %v2605 = vpack.c.b16 %v2522, %v2521
  %v2606 = vpack.c.b16 %v2524, %v2523
  %v2607 = vpack.c.b16 %v2526, %v2525
  %v2608 = vpack.c.b16 %v2528, %v2527
  %v2609 = vpack.c.b16 %v2530, %v2529
  %v2610 = vpack.c.b16 %v2532, %v2531
  %v2611 = vpack.c.b16 %v2534, %v2533
  %v2612 = vpack.c.b16 %v2536, %v2535
  %v2613 = vpack.c.b16 %v2538, %v2537
  %v2614 = vpack.c.b16 %v2540, %v2539
  %v2615 = vpack.c.b16 %v2542, %v2541
  %v2616 = vpack.c.b16 %v2544, %v2543
  %v2617 = vpack.c.b16 %v2546, %v2545
  %v2618 = vpack.c.b16 %v2548, %v2547
  %v2619 = vpack.c.b16 %v2550, %v2549
  %v2620 = vpack.c.b16 %v2552, %v2551
  %v2621 = vpack.c.b16 %v2554, %v2553
  %v2622 = vpack.c.b16 %v2556, %v2555
  %v2623 = vpack.c.b16 %v2558, %v2557
  %v2624 = vpack.c.b16 %v2560, %v2559
  %v2625 = vpack.c.b16 %v2562, %v2561
  %v2626 = vpack.c.b16 %v2564, %v2563
  %v2627 = vpack.c.b16 %v2566, %v2565
  %v2628 = vpack.c.b16 %v2568, %v2567
  %v2629 = vpack.c.b16 %v2570, %v2569
  %v2630 = vpack.c.b16 %v2572, %v2571
  %v2631 = vpack.c.b16 %v2574, %v2573
  %v2632 = vpack.c.b16 %v2576, %v2575
  %v2633 = vpack.c.b16 %v2578, %v2577
  %v2634 = vpack.c.b16 %v2580, %v2579
  %v2635 = vpack.c.b16 %v2582, %v2581
  %v2636 = vpack.c.b16 %v2584, %v2583
  %v2637 = vpack.c.b16 %v2586, %v2585
  %v2638 = vpack.c.b16 %v2588, %v2587
  %vm2689 = vcmask 261120
  %v2691 = vsel %vm2689, %v2343, 0
  %v2694 = vsel %vm2689, %v2350, 0
  %v2697 = vsel %vm2689, %v2357, 0
  %v2700 = vsel %vm2689, %v2364, 0
  %2702 = vmatprep.subr.bf16.mxu0 0
  %2703 = vmatpush1.bf16.msra.mxu0 %v2596
  %2704 = vmatprep.subr.bf16.mxu0 0
  %2705 = vmatpush1.bf16.msra.mxu0 %v2595
  %2706 = vmatprep.subr.bf16.mxu0 0
  %2707 = vmatpush1.bf16.msra.mxu0 %v2594
  %2708 = vmatprep.subr.bf16.mxu0 0
  %2709 = vmatpush1.bf16.msra.mxu0 %v2593
  %2710 = vmatprep.subr.bf16.mxu0 0
  %2711 = vmatpush1.bf16.msra.mxu0 %v2592
  %2712 = vmatprep.subr.bf16.mxu0 0
  %2713 = vmatpush1.bf16.msra.mxu0 %v2591
  %2714 = vmatprep.subr.bf16.mxu0 0
  %2715 = vmatpush1.bf16.msra.mxu0 %v2590
  %2716 = vmatprep.subr.bf16.mxu0 0
  %2717 = vmatpush1.bf16.msra.mxu0 %v2589
  %2718 = vmatprep.subr.bf16.mxu0 0
  %2719 = vmatpush2.bf16.msra.mxu0 %v2604
  %2720 = vmatprep.subr.bf16.mxu0 0
  %2721 = vmatpush2.bf16.msra.mxu0 %v2603
  %2722 = vmatprep.subr.bf16.mxu0 0
  %2723 = vmatpush2.bf16.msra.mxu0 %v2602
  %2724 = vmatprep.subr.bf16.mxu0 0
  %2725 = vmatpush2.bf16.msra.mxu0 %v2601
  %2726 = vmatprep.subr.bf16.mxu0 0
  %2727 = vmatpush2.bf16.msra.mxu0 %v2600
  %2728 = vmatprep.subr.bf16.mxu0 0
  %2729 = vmatpush2.bf16.msra.mxu0 %v2599
  %2730 = vmatprep.subr.bf16.mxu0 0
  %2731 = vmatpush2.bf16.msra.mxu0 %v2598
  %2732 = vmatprep.subr.bf16.mxu0 0
  %2733 = vmatpush2.bf16.msra.mxu0 %v2597
  %2734 = vmatprep.mubr.bf16.mxu0 %v2338
  %2735 = vmatmul.mubr.bf16.gmra.mxu0 %v2337
  %v2736 = vpop.f32.mrf.mxu0
  %v2737 = vadd.f32 %v2212, %v2736
  %v2738 = vpop.f32.mrf.mxu0
  %v2739 = vpop.f32.mrf.mxu0
  %v2740 = vadd.f32 %v2217, %v2739
  %v2741 = vpop.f32.mrf.mxu0
  %2742 = vmatprep.mubr.bf16.mxu0 %v2345
  %2743 = vmatmul.mubr.bf16.gmra.mxu0 %v2344
  %v2744 = vpop.f32.mrf.mxu0
  %v2745 = vadd.f32 %v2222, %v2744
  %v2746 = vpop.f32.mrf.mxu0
  %v2747 = vpop.f32.mrf.mxu0
  %v2748 = vadd.f32 %v2227, %v2747
  %v2749 = vpop.f32.mrf.mxu0
  %2750 = vmatprep.mubr.bf16.mxu0 %v2352
  %2751 = vmatmul.mubr.bf16.gmra.mxu0 %v2351
  %v2752 = vpop.f32.mrf.mxu0
  %v2753 = vadd.f32 %v2232, %v2752
  %v2754 = vpop.f32.mrf.mxu0
  %v2755 = vpop.f32.mrf.mxu0
  %v2756 = vadd.f32 %v2237, %v2755
  %v2757 = vpop.f32.mrf.mxu0
  %2758 = vmatprep.mubr.bf16.mxu0 %v2359
  %2759 = vmatmul.mubr.bf16.gmra.mxu0 %v2358
  %v2760 = vpop.f32.mrf.mxu0
  %v2761 = vadd.f32 %v2242, %v2760
  %v2762 = vpop.f32.mrf.mxu0
  %v2763 = vpop.f32.mrf.mxu0
  %v2764 = vadd.f32 %v2247, %v2763
  %v2765 = vpop.f32.mrf.mxu0
  %2766 = vdwg.mxu0
  %2767 = vmatprep.subr.bf16.mxu0 0
  %2768 = vmatpush1.bf16.msra.mxu0 %v2612
  %2769 = vmatprep.subr.bf16.mxu0 0
  %2770 = vmatpush1.bf16.msra.mxu0 %v2611
  %2771 = vmatprep.subr.bf16.mxu0 0
  %2772 = vmatpush1.bf16.msra.mxu0 %v2610
  %2773 = vmatprep.subr.bf16.mxu0 0
  %2774 = vmatpush1.bf16.msra.mxu0 %v2609
  %2775 = vmatprep.subr.bf16.mxu0 0
  %2776 = vmatpush1.bf16.msra.mxu0 %v2608
  %2777 = vmatprep.subr.bf16.mxu0 0
  %2778 = vmatpush1.bf16.msra.mxu0 %v2607
  %2779 = vmatprep.subr.bf16.mxu0 0
  %2780 = vmatpush1.bf16.msra.mxu0 %v2606
  %2781 = vmatprep.subr.bf16.mxu0 0
  %2782 = vmatpush1.bf16.msra.mxu0 %v2605
  %2783 = vmatprep.subr.bf16.mxu0 0
  %2784 = vmatpush2.bf16.msra.mxu0 %v2620
  %2785 = vmatprep.subr.bf16.mxu0 0
  %2786 = vmatpush2.bf16.msra.mxu0 %v2619
  %2787 = vmatprep.subr.bf16.mxu0 0
  %2788 = vmatpush2.bf16.msra.mxu0 %v2618
  %2789 = vmatprep.subr.bf16.mxu0 0
  %2790 = vmatpush2.bf16.msra.mxu0 %v2617
  %2791 = vmatprep.subr.bf16.mxu0 0
  %2792 = vmatpush2.bf16.msra.mxu0 %v2616
  %2793 = vmatprep.subr.bf16.mxu0 0
  %2794 = vmatpush2.bf16.msra.mxu0 %v2615
  %2795 = vmatprep.subr.bf16.mxu0 0
  %2796 = vmatpush2.bf16.msra.mxu0 %v2614
  %2797 = vmatprep.subr.bf16.mxu0 0
  %2798 = vmatpush2.bf16.msra.mxu0 %v2613
  %2799 = vmatprep.mubr.bf16.mxu0 %v2340
  %2800 = vmatmul.mubr.bf16.gmra.mxu0 %v2339
  %v2801 = vpop.f32.mrf.mxu0
  %v2802 = vadd.f32 %v2737, %v2801
  %v2803 = vpop.f32.mrf.mxu0
  %v2804 = vpop.f32.mrf.mxu0
  %v2805 = vadd.f32 %v2740, %v2804
  %v2806 = vpop.f32.mrf.mxu0
  %2807 = vmatprep.mubr.bf16.mxu0 %v2347
  %2808 = vmatmul.mubr.bf16.gmra.mxu0 %v2346
  %v2809 = vpop.f32.mrf.mxu0
  %v2810 = vadd.f32 %v2745, %v2809
  %v2811 = vpop.f32.mrf.mxu0
  %v2812 = vpop.f32.mrf.mxu0
  %v2813 = vadd.f32 %v2748, %v2812
  %v2814 = vpop.f32.mrf.mxu0
  %2815 = vmatprep.mubr.bf16.mxu0 %v2354
  %2816 = vmatmul.mubr.bf16.gmra.mxu0 %v2353
  %v2817 = vpop.f32.mrf.mxu0
  %v2818 = vadd.f32 %v2753, %v2817
  %v2819 = vpop.f32.mrf.mxu0
  %v2820 = vpop.f32.mrf.mxu0
  %v2821 = vadd.f32 %v2756, %v2820
  %v2822 = vpop.f32.mrf.mxu0
  %2823 = vmatprep.mubr.bf16.mxu0 %v2361
  %2824 = vmatmul.mubr.bf16.gmra.mxu0 %v2360
  %v2825 = vpop.f32.mrf.mxu0
  %v2826 = vadd.f32 %v2761, %v2825
  %v2827 = vpop.f32.mrf.mxu0
  %v2828 = vpop.f32.mrf.mxu0
  %v2829 = vadd.f32 %v2764, %v2828
  %v2830 = vpop.f32.mrf.mxu0
  %2831 = vdwg.mxu0
  %2832 = vmatprep.subr.bf16.mxu0 0
  %2833 = vmatpush1.bf16.msra.mxu0 %v2628
  %2834 = vmatprep.subr.bf16.mxu0 0
  %2835 = vmatpush1.bf16.msra.mxu0 %v2627
  %2836 = vmatprep.subr.bf16.mxu0 0
  %2837 = vmatpush1.bf16.msra.mxu0 %v2626
  %2838 = vmatprep.subr.bf16.mxu0 0
  %2839 = vmatpush1.bf16.msra.mxu0 %v2625
  %2840 = vmatprep.subr.bf16.mxu0 0
  %2841 = vmatpush1.bf16.msra.mxu0 %v2624
  %2842 = vmatprep.subr.bf16.mxu0 0
  %2843 = vmatpush1.bf16.msra.mxu0 %v2623
  %2844 = vmatprep.subr.bf16.mxu0 0
  %2845 = vmatpush1.bf16.msra.mxu0 %v2622
  %2846 = vmatprep.subr.bf16.mxu0 0
  %2847 = vmatpush1.bf16.msra.mxu0 %v2621
  %2848 = vmatprep.subr.bf16.mxu0 0
  %2849 = vmatpush2.bf16.msra.mxu0 %v2636
  %2850 = vmatprep.subr.bf16.mxu0 0
  %2851 = vmatpush2.bf16.msra.mxu0 %v2635
  %2852 = vmatprep.subr.bf16.mxu0 0
  %2853 = vmatpush2.bf16.msra.mxu0 %v2634
  %2854 = vmatprep.subr.bf16.mxu0 0
  %2855 = vmatpush2.bf16.msra.mxu0 %v2633
  %2856 = vmatprep.subr.bf16.mxu0 0
  %2857 = vmatpush2.bf16.msra.mxu0 %v2632
  %2858 = vmatprep.subr.bf16.mxu0 0
  %2859 = vmatpush2.bf16.msra.mxu0 %v2631
  %2860 = vmatprep.subr.bf16.mxu0 0
  %2861 = vmatpush2.bf16.msra.mxu0 %v2630
  %2862 = vmatprep.subr.bf16.mxu0 0
  %2863 = vmatpush2.bf16.msra.mxu0 %v2629
  %2864 = vmatprep.mubr.bf16.mxu0 %v2342
  %2865 = vmatmul.mubr.bf16.gmra.mxu0 %v2341
  %v2866 = vpop.f32.mrf.mxu0
  %v2867 = vadd.f32 %v2802, %v2866
  %v2868 = vpop.f32.mrf.mxu0
  %v2869 = vpop.f32.mrf.mxu0
  %v2870 = vadd.f32 %v2805, %v2869
  %v2871 = vpop.f32.mrf.mxu0
  %2872 = vmatprep.mubr.bf16.mxu0 %v2349
  %2873 = vmatmul.mubr.bf16.gmra.mxu0 %v2348
  %v2874 = vpop.f32.mrf.mxu0
  %v2875 = vadd.f32 %v2810, %v2874
  %v2876 = vpop.f32.mrf.mxu0
  %v2877 = vpop.f32.mrf.mxu0
  %v2878 = vadd.f32 %v2813, %v2877
  %v2879 = vpop.f32.mrf.mxu0
  %2880 = vmatprep.mubr.bf16.mxu0 %v2356
  %2881 = vmatmul.mubr.bf16.gmra.mxu0 %v2355
  %v2882 = vpop.f32.mrf.mxu0
  %v2883 = vadd.f32 %v2818, %v2882
  %v2884 = vpop.f32.mrf.mxu0
  %v2885 = vpop.f32.mrf.mxu0
  %v2886 = vadd.f32 %v2821, %v2885
  %v2887 = vpop.f32.mrf.mxu0
  %2888 = vmatprep.mubr.bf16.mxu0 %v2363
  %2889 = vmatmul.mubr.bf16.gmra.mxu0 %v2362
  %v2890 = vpop.f32.mrf.mxu0
  %v2891 = vadd.f32 %v2826, %v2890
  %v2892 = vpop.f32.mrf.mxu0
  %v2893 = vpop.f32.mrf.mxu0
  %v2894 = vadd.f32 %v2829, %v2893
  %v2895 = vpop.f32.mrf.mxu0
  %2896 = vdwg.mxu0
  %2897 = vmatprep.subr.bf16.mxu0 0
  %2898 = vmatpush1.bf16.msra.mxu0 0
  %2899 = vmatprep.subr.bf16.mxu0 0
  %2900 = vmatpush1.bf16.msra.mxu0 0
  %2901 = vmatprep.subr.bf16.mxu0 0
  %2902 = vmatpush1.bf16.msra.mxu0 0
  %2903 = vmatprep.subr.bf16.mxu0 0
  %2904 = vmatpush1.bf16.msra.mxu0 0
  %2905 = vmatprep.subr.bf16.mxu0 0
  %2906 = vmatpush1.bf16.msra.mxu0 0
  %2907 = vmatprep.subr.bf16.mxu0 0
  %2908 = vmatpush1.bf16.msra.mxu0 0
  %2909 = vmatprep.subr.bf16.mxu0 0
  %2910 = vmatpush1.bf16.msra.mxu0 %v2638
  %2911 = vmatprep.subr.bf16.mxu0 0
  %2912 = vmatpush1.bf16.msra.mxu0 %v2637
  %2913 = vmatprep.subr.bf16.mxu0 0
  %2914 = vmatpush2.bf16.msra.mxu0 0
  %2915 = vmatprep.subr.bf16.mxu0 0
  %2916 = vmatpush2.bf16.msra.mxu0 0
  %2917 = vmatprep.subr.bf16.mxu0 0
  %2918 = vmatpush2.bf16.msra.mxu0 0
  %2919 = vmatprep.subr.bf16.mxu0 0
  %2920 = vmatpush2.bf16.msra.mxu0 0
  %2921 = vmatprep.subr.bf16.mxu0 0
  %2922 = vmatpush2.bf16.msra.mxu0 0
  %2923 = vmatprep.subr.bf16.mxu0 0
  %2924 = vmatpush2.bf16.msra.mxu0 0
  %2925 = vmatprep.subr.bf16.mxu0 0
  %2926 = vmatpush2.bf16.msra.mxu0 0
  %2927 = vmatprep.subr.bf16.mxu0 0
  %2928 = vmatpush2.bf16.msra.mxu0 0
  %2929 = vmatprep.mubr.bf16.mxu0 0
  %2930 = vmatmul.mubr.bf16.gmra.mxu0 %v2691
  %v2931 = vpop.f32.mrf.mxu0
  %v2932 = vadd.f32 %v2867, %v2931
  %v2933 = vpop.f32.mrf.mxu0
  %v2934 = vpop.f32.mrf.mxu0
  %v2935 = vadd.f32 %v2870, %v2934
  %v2936 = vpop.f32.mrf.mxu0
  %2937 = vmatprep.mubr.bf16.mxu0 0
  %2938 = vmatmul.mubr.bf16.gmra.mxu0 %v2694
  %v2939 = vpop.f32.mrf.mxu0
  %v2940 = vadd.f32 %v2875, %v2939
  %v2941 = vpop.f32.mrf.mxu0
  %v2942 = vpop.f32.mrf.mxu0
  %v2943 = vadd.f32 %v2878, %v2942
  %v2944 = vpop.f32.mrf.mxu0
  %2945 = vmatprep.mubr.bf16.mxu0 0
  %2946 = vmatmul.mubr.bf16.gmra.mxu0 %v2697
  %v2947 = vpop.f32.mrf.mxu0
  %v2948 = vadd.f32 %v2883, %v2947
  %v2949 = vpop.f32.mrf.mxu0
  %v2950 = vpop.f32.mrf.mxu0
  %v2951 = vadd.f32 %v2886, %v2950
  %v2952 = vpop.f32.mrf.mxu0
  %2953 = vmatprep.mubr.bf16.mxu0 0
  %2954 = vmatmul.mubr.bf16.gmra.mxu0 %v2700
  %v2955 = vpop.f32.mrf.mxu0
  %v2956 = vadd.f32 %v2891, %v2955
  %v2957 = vpop.f32.mrf.mxu0
  %v2958 = vpop.f32.mrf.mxu0
  %v2959 = vadd.f32 %v2894, %v2958
  %v2960 = vpop.f32.mrf.mxu0
  %2961 = vdwg.mxu0
  %v2962 = vmul.f32 %v2932, 0.2
  %v2963 = vmul.f32 %v2935, 0.2
  %v2964 = vmul.f32 %v2940, 0.2
  %v2965 = vmul.f32 %v2943, 0.2
  %v2966 = vmul.f32 %v2948, 0.2
  %v2967 = vmul.f32 %v2951, 0.2
  %v2968 = vmul.f32 %v2956, 0.2
  %v2969 = vmul.f32 %v2959, 0.2
  %v2970 = vmax.f32 %v2932, %v2962
  %v2971 = vmax.f32 %v2935, %v2963
  %v2972 = vmax.f32 %v2940, %v2964
  %v2973 = vmax.f32 %v2943, %v2965
  %v2974 = vmax.f32 %v2948, %v2966
  %v2975 = vmax.f32 %v2951, %v2967
  %v2976 = vmax.f32 %v2956, %v2968
  %v2977 = vmax.f32 %v2959, %v2969
  %v2978 = vld [vmem:[%s5] sm:$0xff]
  %v2979 = vld [vmem:[%s5 + $0x8] sm:$0xff]
  %v2980 = vld [vmem:[%s5 + $0x10] sm:$0xff]
  %v2981 = vld [vmem:[%s5 + $0x18] sm:$0xff]
  %v2982 = vld [vmem:[%s5 + $0x20] sm:$0xff]
  %v2983 = vld [vmem:[%s5 + $0x28] sm:$0xff]
  %v2984 = vld [vmem:[%s5 + $0x30] sm:$0xff]
  %v2985 = vld [vmem:[%s5 + $0x38] sm:$0xff]
  %2987 = vset.pattern.permute.xlu0 0
  %2988 = vperm.xlu0 %2987, %v2978
  %v2989 = vpop.permute.xlu0 %2988
  %2992 = vset.pattern.permute.xlu0 0
  %2993 = vperm.xlu0 %2992, %v2979
  %v2994 = vpop.permute.xlu0 %2993
  %2997 = vset.pattern.permute.xlu0 0
  %2998 = vperm.xlu0 %2997, %v2980
  %v2999 = vpop.permute.xlu0 %2998
  %3002 = vset.pattern.permute.xlu0 0
  %3003 = vperm.xlu0 %3002, %v2981
  %v3004 = vpop.permute.xlu0 %3003
  %3007 = vset.pattern.permute.xlu0 0
  %3008 = vperm.xlu0 %3007, %v2982
  %v3009 = vpop.permute.xlu0 %3008
  %3012 = vset.pattern.permute.xlu0 0
  %3013 = vperm.xlu0 %3012, %v2983
  %v3014 = vpop.permute.xlu0 %3013
  %3017 = vset.pattern.permute.xlu0 0
  %3018 = vperm.xlu0 %3017, %v2984
  %v3019 = vpop.permute.xlu0 %3018
  %3022 = vset.pattern.permute.xlu0 0
  %3023 = vperm.xlu0 %3022, %v2985
  %v3024 = vpop.permute.xlu0 %3023
  %v3026 = vmul.f32 %v2970, %v2989
  %v3027 = vmul.f32 %v2971, %v2994
  %v3028 = vmul.f32 %v2972, %v2999
  %v3029 = vmul.f32 %v2973, %v3004
  %v3030 = vmul.f32 %v2974, %v3009
  %v3031 = vmul.f32 %v2975, %v3014
  %v3032 = vmul.f32 %v2976, %v3019
  %v3033 = vmul.f32 %v2977, %v3024
  %v3034 = vadd.f32 %v3026, %v3027
  %v3035 = vadd.f32 %v3034, %v3028
  %v3036 = vadd.f32 %v3035, %v3029
  %v3037 = vadd.f32 %v3036, %v3030
  %v3038 = vadd.f32 %v3037, %v3031
  %v3039 = vadd.f32 %v3038, %v3032
  %v3040 = vadd.f32 %v3039, %v3033
  %v3041 = vrot.slane %v3040, 4
  %v3042 = vadd.f32 %v3040, %v3041
  %v3043 = vrot.slane %v3042, 2
  %v3044 = vadd.f32 %v3042, %v3043
  %v3045 = vrot.slane %v3044, 1
  %v3046 = vadd.f32 %v3044, %v3045
  %v3047 = vld [vmem:[#allocation3] sm:$0x1]
  %3049 = vset.pattern.permute.xlu0 0
  %3050 = vperm.xlu0 %3049, %v3047
  %v3051 = vpop.permute.xlu0 %3050
  %v3053 = vlaneseq
  %v3054 = vshrl.u32 %v3053, 7
  %v3055 = vsub.s32 0, %v3054
  %v3056 = vrot.slane %v3051, %v3055
  %v3057 = vadd.f32 %v3046, %v3056
  %v3058 = vmul.f32 %v3057, 0.5
  %v3059 = vtanh.pop %v3058
  %v3060 = vadd.f32 %v3059, 1.0
  %v3061 = vmul.f32 %v3060, 0.5
  %3062 = vst [vmem:[%s7] sm:$0x1] %v3061
  // Predicated region
  $region30: #{d_net_forward.1} parent=0 // pred_check
    _
  $region31: #{d_net_forward.1} parent=0 // pred_check_branch
    %3064 = sbr.rel (0) target = $region33
  $region32: #{d_net_forward.1} parent=0 // pred_region
    _
  $region33: #{d_net_forward.1} parent=0 // pred_fallthru
    _
  // Predicated region
  $region34: #{d_net_forward.1} parent=0 // pred_check
    _
  $region35: #{d_net_forward.1} parent=0 // pred_check_branch
    %3066 = sbr.rel (0) target = $region37
  $region36: #{d_net_forward.1} parent=0 // pred_region
    _
  $region37: #{d_net_forward.1} parent=0 // pred_fallthru
    _

</llo_original>
